<compile_context>
chip_gen: v7x
topology: tpu7x:2x2x1
jax: 0.10.0
libtpu: 0.0.40
codegen_flags: <defaults>
</compile_context>

<pallas_src>
import functools

import jax
import jax.numpy as jnp
from jax import lax
from jax.experimental import pallas as pl
from jax.experimental.pallas import tpu as pltpu

_LANES = 128
_NUM_CORES = 2          # leading "parallel" grid axis (megacore split on v7x; harmless on 1-TC chips)


def _round_up(x, m):
    return (x + m - 1) // m * m


# ----------------------------- Pallas kernel -----------------------------

def fused_loss_kernel(pr_ref, pt_ref, w_ref, consts_ref,
                      perc_ref, lpips_ref, l1_ref, *, cin, cout):
    """One row-tile of all three losses, reduced fully in-kernel.

    pr/pt     : (TM, Kp) bf16 im2col patches of the raw rendered / target images.
    w_ref     : (Kp, 128) bf16 concatenated conv weights: perceptual branch (ImageNet
                normalization folded in) in lanes [0,cout), LPIPS branch (LPIPS scaling
                folded in) in lanes [cout, 2*cout), zero elsewhere.
    consts_ref: (8, 128) f32; row 0 = concatenated bias, row 1 = learned LPIPS 1x1
                channel weights (zero outside the LPIPS lanes).
    perc/lpips/l1 out blocks: (1,1,128)/(1,1,128)/(1,1,Kp) per-core lane-dense partial
    sums, resident across the reduction axis; division by true counts is in the wrapper.
    """
    i = pl.program_id(1)

    @pl.when(i == 0)
    def _():
        perc_ref[...] = jnp.zeros_like(perc_ref)
        lpips_ref[...] = jnp.zeros_like(lpips_ref)
        l1_ref[...] = jnp.zeros_like(l1_ref)

    k_pad = pr_ref.shape[1]
    c_pad = w_ref.shape[1]

    pr = pr_ref[...]
    pt = pt_ref[...]
    w = w_ref[...]
    bias = consts_ref[0:1, :]
    lw = consts_ref[1:2, :]

    # --- one matmul per patch slab: both branches share the 128-wide RHS ---
    fr = jnp.maximum(jnp.dot(pr, w, preferred_element_type=jnp.float32) + bias, 0.0)
    ft = jnp.maximum(jnp.dot(pt, w, preferred_element_type=jnp.float32) + bias, 0.0)

    lane = lax.broadcasted_iota(jnp.int32, (1, c_pad), 1)
    pmask = (lane < cout).astype(jnp.float32)        # perceptual lanes; lanes >= 2*cout are 0 anyway
    lmask = (lane >= cout).astype(jnp.float32)       # LPIPS lanes

    # perceptual branch: L1 on features
    perc_ref[...] += jnp.sum(jnp.abs(fr - ft) * pmask, axis=0, keepdims=True)[None]

    # LPIPS branch: channel-normalize, squared diff, learned 1x1 channel weights
    gr = fr * lmask
    gt = ft * lmask
    gr = gr * lax.rsqrt(jnp.sum(gr * gr, axis=-1, keepdims=True) + 1e-10)
    gt = gt * lax.rsqrt(jnp.sum(gt * gt, axis=-1, keepdims=True) + 1e-10)
    lpips_ref[...] += jnp.sum(((gr - gt) ** 2) * lw, axis=0, keepdims=True)[None]

    # raw-image L1: the center tap (dy=1,dx=1) columns of the patches ARE the raw pixels
    kl = lax.broadcasted_iota(jnp.int32, (1, k_pad), 1)
    cmask = ((kl >= 4 * cin) & (kl < 5 * cin)).astype(jnp.float32)
    d = jnp.abs(pr.astype(jnp.float32) - pt.astype(jnp.float32)) * cmask
    l1_ref[...] += jnp.sum(d, axis=0, keepdims=True)[None]


# ----------------------------- wrappers (glue) -----------------------------

def _im2col_3x3(x_nhwc):
    """(N,H,W,C) -> (N*H*W, 9*C) with zero padding=1 (pure pads/slices/reshapes)."""
    n, h, w, c = x_nhwc.shape
    xp = jnp.pad(x_nhwc, ((0, 0), (1, 1), (1, 1), (0, 0)))
    cols = [xp[:, dy:dy + h, dx:dx + w, :] for dy in range(3) for dx in range(3)]
    return jnp.concatenate(cols, axis=-1).reshape(n * h * w, 9 * c)


def _fold_affine_into_conv(conv_w, conv_b, mean, std):
    """conv((x - mean)/std) == conv'(x) with W'[k,c] = W[k,c]/std_k, b' = b - sum_k W*mean/std.

    Note: not exactly equivalent at zero-padded image borders (the folded bias still
    applies the -W*mean/std correction for out-of-image taps); acceptable for the
    stand-in feature extractor.
    """
    _, _, cin, cout = conv_w.shape
    w = conv_w.reshape(9 * cin, cout).astype(jnp.float32)
    m_col = jnp.tile(mean.astype(jnp.float32), 9)[:, None]      # (9*cin, 1), channel-fastest
    s_col = jnp.tile(std.astype(jnp.float32), 9)[:, None]
    w_f = w / s_col
    b_f = conv_b.astype(jnp.float32) - jnp.sum(w * (m_col / s_col), axis=0)
    return w_f, b_f                                             # (9*cin, cout), (cout,)


def fused_losses(rendered_nchw, target_nchw, params, *, block_rows=1024,
                 num_cores=_NUM_CORES):
    """Perceptual (feature-L1), LPIPS, and raw-pixel L1 in a single fused Pallas call."""
    conv_w = params["conv_w"]                                   # (3, 3, cin, cout)
    conv_b = params["conv_b"]
    cin, cout = conv_w.shape[2], conv_w.shape[3]

    # Fold the two per-branch affine input normalizations into the conv weights.
    wp_f, bp_f = _fold_affine_into_conv(conv_w, conv_b, _IMAGENET_MEAN, _IMAGENET_STD)
    # LPIPS input: (2x - 1 - shift)/scale == (x - (1+shift)/2) / (scale/2)
    wl_f, bl_f = _fold_affine_into_conv(conv_w, conv_b,
                                        (1.0 + _LPIPS_SHIFT) / 2.0, _LPIPS_SCALE / 2.0)

    k = 9 * cin
    k_pad = _round_up(k, 32)
    c_pad = _LANES

    # Concatenate both branches into one 128-lane RHS / bias / LPIPS-weight vector.
    w_cat = jnp.zeros((k_pad, c_pad), jnp.float32)
    w_cat = w_cat.at[:k, 0:cout].set(wp_f).at[:k, cout:2 * cout].set(wl_f)
    w_cat = w_cat.astype(jnp.bfloat16)
    b_cat = jnp.zeros((c_pad,), jnp.float32).at[0:cout].set(bp_f).at[cout:2 * cout].set(bl_f)
    lw_vec = jnp.zeros((c_pad,), jnp.float32).at[cout:2 * cout].set(
        params["lpips_lin"].astype(jnp.float32))
    consts = jnp.zeros((8, c_pad), jnp.float32).at[0].set(b_cat).at[1].set(lw_vec)

    # bf16-first im2col: raw images cast once, patch slab materialized once in bf16.
    r = jnp.transpose(rendered_nchw, (0, 2, 3, 1)).astype(jnp.bfloat16)   # NHWC
    t = jnp.transpose(target_nchw, (0, 2, 3, 1)).astype(jnp.bfloat16)
    pr = _im2col_3x3(r)
    pt = _im2col_3x3(t)
    m = pr.shape[0]

    per_core = -(-m // num_cores)
    tm = min(block_rows, _round_up(per_core, 16))
    m_pad = _round_up(m, num_cores * tm)
    steps = m_pad // (num_cores * tm)
    pad = ((0, m_pad - m), (0, k_pad - k))
    pr = jnp.pad(pr, pad)                 # padded rows / K-columns contribute exactly 0
    pt = jnp.pad(pt, pad)

    kernel = functools.partial(fused_loss_kernel, cin=cin, cout=cout)
    patch_spec = pl.BlockSpec((tm, k_pad), lambda c, i: (c * steps + i, 0))

    perc_p, lpips_p, l1_p = pl.pallas_call(
        kernel,
        out_shape=(jax.ShapeDtypeStruct((num_cores, 1, c_pad), jnp.float32),
                   jax.ShapeDtypeStruct((num_cores, 1, c_pad), jnp.float32),
                   jax.ShapeDtypeStruct((num_cores, 1, k_pad), jnp.float32)),
        grid=(num_cores, steps),
        in_specs=[
            patch_spec,
            pl.BlockSpec((tm, k_pad), lambda c, i: (c * steps + i, 0)),
            pl.BlockSpec((k_pad, c_pad), lambda c, i: (0, 0)),
            pl.BlockSpec((8, c_pad), lambda c, i: (0, 0)),
        ],
        out_specs=(pl.BlockSpec((1, 1, c_pad), lambda c, i: (c, 0, 0)),
                   pl.BlockSpec((1, 1, c_pad), lambda c, i: (c, 0, 0)),
                   pl.BlockSpec((1, 1, k_pad), lambda c, i: (c, 0, 0))),
        compiler_params=pltpu.CompilerParams(
            dimension_semantics=("parallel", "arbitrary"),
            vmem_limit_bytes=32 * 1024 * 1024),
    )(pr, pt, w_cat, consts)

    perceptual = jnp.sum(perc_p) / float(m * cout)   # mean over all feature elements
    lpips_val = jnp.sum(lpips_p) / float(m)          # spatial+batch mean of per-location sums
    l1_val = jnp.sum(l1_p) / float(m * cin)          # mean absolute error over all pixels
    return perceptual, l1_val, lpips_val


# ----------------------------- parameters ---------------------------------

def init_params(key, cin=3, cfeat=8):
    k1, k2 = jax.random.split(key)
    conv_w = jax.random.normal(k1, (3, 3, cin, cfeat), jnp.float32) * jnp.sqrt(2.0 / (9 * cin))
    conv_b = jnp.zeros((cfeat,), jnp.float32)
    lpips_lin = jnp.abs(jax.random.normal(k2, (cfeat,), jnp.float32)) * 0.1
    return {
        "conv_w": conv_w,
        "conv_b": conv_b,
        "lpips_lin": lpips_lin,
        # nn.ParameterDict: all balance weights initialized to ones(1)
        "weights": {
            "perceptual": jnp.ones((1,), jnp.float32),
            "l1": jnp.ones((1,), jnp.float32),
            "lpips": jnp.ones((1,), jnp.float32),
        },
    }


_IMAGENET_MEAN = jnp.array([0.485, 0.456, 0.406], jnp.float32)
_IMAGENET_STD = jnp.array([0.229, 0.224, 0.225], jnp.float32)
_LPIPS_SHIFT = jnp.array([-0.030, -0.088, -0.188], jnp.float32)
_LPIPS_SCALE = jnp.array([0.458, 0.448, 0.450], jnp.float32)


# ----------------------------- forward ------------------------------------

def gradnorm_loss(params, rendered, target):
    """Forward of GradNormLoss. rendered/target: NCHW float32 in [0, 1]."""
    losses = {}

    # perceptual (VGG stand-in, L1 on features) + raw L1 + LPIPS head, all in one kernel
    perceptual, l1_val, lpips_val = fused_losses(rendered, target, params)
    losses["perceptual"] = perceptual
    losses["l1"] = l1_val
    losses["lpips"] = lpips_val

    # TODO(synk): initial_losses bookkeeping in the PyTorch module is stateful
    # (records .item() on first call) and does not affect forward outputs; skipped.

    total = jnp.zeros((1,), jnp.float32)
    for name in ("perceptual", "l1", "lpips"):
        weighted = params["weights"][name] * losses[name]    # shape (1,), like torch
        losses[f"{name}_weighted"] = weighted
        total = total + weighted
    losses["total"] = total
    return losses


# ----------------------------- main ----------------------------------------

if __name__ == "__main__":
    key = jax.random.PRNGKey(0)
    k_params, k_rendered, k_target = jax.random.split(key, 3)

    params = init_params(k_params)
    rendered = jax.random.uniform(k_rendered, (2, 3, 16, 16), jnp.float32)  # NCHW
    target = jax.random.uniform(k_target, (2, 3, 16, 16), jnp.float32)      # NCHW

    loss_fn = jax.jit(functools.partial(gradnorm_loss, params))
    out = loss_fn(rendered, target)
    jax.block_until_ready(out["total"])
    print("KERNEL_OK")
</pallas_src>

<mosaic_0001>
module attributes {stable_mosaic.version = 11 : i64} {
  func.func @fused_loss_kernel(%arg0: i32, %arg1: i32, %arg2: memref<256x32xbf16, #tpu.memory_space<vmem>>, %arg3: memref<256x32xbf16, #tpu.memory_space<vmem>>, %arg4: memref<32x128xbf16, #tpu.memory_space<vmem>>, %arg5: memref<8x128xf32, #tpu.memory_space<vmem>>, %arg6: memref<1x1x128xf32, #tpu.memory_space<vmem>>, %arg7: memref<1x1x128xf32, #tpu.memory_space<vmem>>, %arg8: memref<1x1x32xf32, #tpu.memory_space<vmem>>) attributes {dimension_semantics = [#tpu.dimension_semantics<parallel>, #tpu.dimension_semantics<arbitrary>], iteration_bounds = array<i64: 2, 1>, scalar_prefetch = 0 : i64, scratch_operands = 0 : i64, tpu.core_type = #tpu.core_type<tc>, window_params = [{transform_indices = @transform_0, window_bounds = array<i64: 256, 32>}, {transform_indices = @transform_1, window_bounds = array<i64: 256, 32>}, {pipeline_mode = #tpu.pipeline_mode<synchronous>, transform_indices = @transform_2, window_bounds = array<i64: 32, 128>}, {pipeline_mode = #tpu.pipeline_mode<synchronous>, transform_indices = @transform_3, window_bounds = array<i64: 8, 128>}, {transform_indices = @transform_4, window_bounds = array<i64: 1, 1, 128>}, {transform_indices = @transform_5, window_bounds = array<i64: 1, 1, 128>}, {transform_indices = @transform_6, window_bounds = array<i64: 1, 1, 32>}]} {
    %c0_i32 = arith.constant 0 : i32
    %0 = arith.cmpi eq, %arg1, %c0_i32 : i32
    %1 = arith.extui %0 : i1 to i32
    %c0_i32_0 = arith.constant 0 : i32
    %2 = arith.cmpi ne, %1, %c0_i32_0 : i32
    scf.if %2 {
      %cst_38 = arith.constant 0.000000e+00 : f32
      %87 = vector.broadcast %cst_38 : f32 to vector<1x1x128xf32>
      %c0_39 = arith.constant 0 : index
      %c0_40 = arith.constant 0 : index
      %c0_41 = arith.constant 0 : index
      %88 = vector.load %arg6[%c0_39, %c0_40, %c0_41] : memref<1x1x128xf32, #tpu.memory_space<vmem>>, vector<1x1x128xf32>
      tpu.vector_store %arg6[%c0_39, %c0_40, %c0_41], %87 {strides = array<i32>} : memref<1x1x128xf32, #tpu.memory_space<vmem>>, vector<1x1x128xf32>,
      %cst_42 = arith.constant 0.000000e+00 : f32
      %89 = vector.broadcast %cst_42 : f32 to vector<1x1x128xf32>
      %c0_43 = arith.constant 0 : index
      %c0_44 = arith.constant 0 : index
      %c0_45 = arith.constant 0 : index
      %90 = vector.load %arg7[%c0_43, %c0_44, %c0_45] : memref<1x1x128xf32, #tpu.memory_space<vmem>>, vector<1x1x128xf32>
      tpu.vector_store %arg7[%c0_43, %c0_44, %c0_45], %89 {strides = array<i32>} : memref<1x1x128xf32, #tpu.memory_space<vmem>>, vector<1x1x128xf32>,
      %cst_46 = arith.constant 0.000000e+00 : f32
      %91 = vector.broadcast %cst_46 : f32 to vector<1x1x32xf32>
      %c0_47 = arith.constant 0 : index
      %c0_48 = arith.constant 0 : index
      %c0_49 = arith.constant 0 : index
      %92 = vector.load %arg8[%c0_47, %c0_48, %c0_49] : memref<1x1x32xf32, #tpu.memory_space<vmem>>, vector<1x1x32xf32>
      tpu.vector_store %arg8[%c0_47, %c0_48, %c0_49], %91 {strides = array<i32>} : memref<1x1x32xf32, #tpu.memory_space<vmem>>, vector<1x1x32xf32>,
    } else {
    }
    %c0 = arith.constant 0 : index
    %c0_1 = arith.constant 0 : index
    %3 = vector.load %arg2[%c0, %c0_1] : memref<256x32xbf16, #tpu.memory_space<vmem>>, vector<256x32xbf16>
    %c0_2 = arith.constant 0 : index
    %c0_3 = arith.constant 0 : index
    %4 = vector.load %arg3[%c0_2, %c0_3] : memref<256x32xbf16, #tpu.memory_space<vmem>>, vector<256x32xbf16>
    %c0_4 = arith.constant 0 : index
    %c0_5 = arith.constant 0 : index
    %5 = vector.load %arg4[%c0_4, %c0_5] : memref<32x128xbf16, #tpu.memory_space<vmem>>, vector<32x128xbf16>
    %c0_6 = arith.constant 0 : index
    %c0_7 = arith.constant 0 : index
    %6 = vector.load %arg5[%c0_6, %c0_7] : memref<8x128xf32, #tpu.memory_space<vmem>>, vector<1x128xf32>
    %c1 = arith.constant 1 : index
    %c0_8 = arith.constant 0 : index
    %7 = vector.load %arg5[%c1, %c0_8] : memref<8x128xf32, #tpu.memory_space<vmem>>, vector<1x128xf32>
    %cst = arith.constant dense<0.000000e+00> : vector<256x128xf32>
    %8 = tpu.matmul %3, %5, %cst {dimension_numbers = #tpu.dot_dimension_numbers<[1], [0], [0], [1], [0, 0, 1, 1], [], []>} : vector<256x32xbf16>, vector<32x128xbf16>, vector<256x128xf32> -> vector<256x128xf32>
    %9 = vector.broadcast %6 : vector<1x128xf32> to vector<256x128xf32>
    %10 = arith.addf %8, %9 : vector<256x128xf32>
    %cst_9 = arith.constant 0.000000e+00 : f32
    %11 = vector.broadcast %cst_9 : f32 to vector<256x128xf32>
    %12 = arith.maximumf %10, %11 : vector<256x128xf32>
    %cst_10 = arith.constant dense<0.000000e+00> : vector<256x128xf32>
    %13 = tpu.matmul %4, %5, %cst_10 {dimension_numbers = #tpu.dot_dimension_numbers<[1], [0], [0], [1], [0, 0, 1, 1], [], []>} : vector<256x32xbf16>, vector<32x128xbf16>, vector<256x128xf32> -> vector<256x128xf32>
    %14 = vector.broadcast %6 : vector<1x128xf32> to vector<256x128xf32>
    %15 = arith.addf %13, %14 : vector<256x128xf32>
    %cst_11 = arith.constant 0.000000e+00 : f32
    %16 = vector.broadcast %cst_11 : f32 to vector<256x128xf32>
    %17 = arith.maximumf %15, %16 : vector<256x128xf32>
    %18 = tpu.iota {dimensions = array<i32: 1>} : vector<1x128xi32>
    %c8_i32 = arith.constant 8 : i32
    %19 = vector.broadcast %c8_i32 : i32 to vector<1x128xi32>
    %20 = arith.cmpi slt, %18, %19 : vector<1x128xi32>
    %21 = arith.extui %20 : vector<1x128xi1> to vector<1x128xi32>
    %22 = arith.sitofp %21 : vector<1x128xi32> to vector<1x128xf32>
    %c8_i32_12 = arith.constant 8 : i32
    %23 = vector.broadcast %c8_i32_12 : i32 to vector<1x128xi32>
    %24 = arith.cmpi sge, %18, %23 : vector<1x128xi32>
    %25 = arith.extui %24 : vector<1x128xi1> to vector<1x128xi32>
    %26 = arith.sitofp %25 : vector<1x128xi32> to vector<1x128xf32>
    %c0_13 = arith.constant 0 : index
    %c0_14 = arith.constant 0 : index
    %c0_15 = arith.constant 0 : index
    %27 = vector.load %arg6[%c0_13, %c0_14, %c0_15] : memref<1x1x128xf32, #tpu.memory_space<vmem>>, vector<1x1x128xf32>
    %28 = arith.subf %12, %17 : vector<256x128xf32>
    %29 = math.absf %28 : vector<256x128xf32>
    %30 = vector.broadcast %22 : vector<1x128xf32> to vector<256x128xf32>
    %31 = arith.mulf %29, %30 : vector<256x128xf32>
    %cst_16 = arith.constant dense<0.000000e+00> : vector<128xf32>
    %32 = vector.multi_reduction <add>, %31, %cst_16 [0] : vector<256x128xf32> to vector<128xf32>
    %33 = vector.shape_cast %32 : vector<128xf32> to vector<1x128xf32>
    %34 = vector.shape_cast %33 : vector<1x128xf32> to vector<1x1x128xf32>
    %35 = arith.addf %27, %34 : vector<1x1x128xf32>
    %c0_17 = arith.constant 0 : index
    %c0_18 = arith.constant 0 : index
    %c0_19 = arith.constant 0 : index
    %36 = vector.load %arg6[%c0_17, %c0_18, %c0_19] : memref<1x1x128xf32, #tpu.memory_space<vmem>>, vector<1x1x128xf32>
    tpu.vector_store %arg6[%c0_17, %c0_18, %c0_19], %35 {strides = array<i32>} : memref<1x1x128xf32, #tpu.memory_space<vmem>>, vector<1x1x128xf32>,
    %37 = vector.broadcast %26 : vector<1x128xf32> to vector<256x128xf32>
    %38 = arith.mulf %12, %37 : vector<256x128xf32>
    %39 = vector.broadcast %26 : vector<1x128xf32> to vector<256x128xf32>
    %40 = arith.mulf %17, %39 : vector<256x128xf32>
    %41 = arith.mulf %38, %38 : vector<256x128xf32>
    %cst_20 = arith.constant dense<0.000000e+00> : vector<256xf32>
    %42 = vector.multi_reduction <add>, %41, %cst_20 [1] : vector<256x128xf32> to vector<256xf32>
    %43 = vector.shape_cast %42 : vector<256xf32> to vector<256x1xf32>
    %cst_21 = arith.constant 1.000000e-10 : f32
    %44 = vector.broadcast %cst_21 : f32 to vector<256x1xf32>
    %45 = arith.addf %43, %44 : vector<256x1xf32>
    %46 = math.rsqrt %45 : vector<256x1xf32>
    %47 = vector.broadcast %46 : vector<256x1xf32> to vector<256x128xf32>
    %48 = arith.mulf %38, %47 : vector<256x128xf32>
    %49 = arith.mulf %40, %40 : vector<256x128xf32>
    %cst_22 = arith.constant dense<0.000000e+00> : vector<256xf32>
    %50 = vector.multi_reduction <add>, %49, %cst_22 [1] : vector<256x128xf32> to vector<256xf32>
    %51 = vector.shape_cast %50 : vector<256xf32> to vector<256x1xf32>
    %cst_23 = arith.constant 1.000000e-10 : f32
    %52 = vector.broadcast %cst_23 : f32 to vector<256x1xf32>
    %53 = arith.addf %51, %52 : vector<256x1xf32>
    %54 = math.rsqrt %53 : vector<256x1xf32>
    %55 = vector.broadcast %54 : vector<256x1xf32> to vector<256x128xf32>
    %56 = arith.mulf %40, %55 : vector<256x128xf32>
    %c0_24 = arith.constant 0 : index
    %c0_25 = arith.constant 0 : index
    %c0_26 = arith.constant 0 : index
    %57 = vector.load %arg7[%c0_24, %c0_25, %c0_26] : memref<1x1x128xf32, #tpu.memory_space<vmem>>, vector<1x1x128xf32>
    %58 = arith.subf %48, %56 : vector<256x128xf32>
    %59 = arith.mulf %58, %58 : vector<256x128xf32>
    %60 = vector.broadcast %7 : vector<1x128xf32> to vector<256x128xf32>
    %61 = arith.mulf %59, %60 : vector<256x128xf32>
    %cst_27 = arith.constant dense<0.000000e+00> : vector<128xf32>
    %62 = vector.multi_reduction <add>, %61, %cst_27 [0] : vector<256x128xf32> to vector<128xf32>
    %63 = vector.shape_cast %62 : vector<128xf32> to vector<1x128xf32>
    %64 = vector.shape_cast %63 : vector<1x128xf32> to vector<1x1x128xf32>
    %65 = arith.addf %57, %64 : vector<1x1x128xf32>
    %c0_28 = arith.constant 0 : index
    %c0_29 = arith.constant 0 : index
    %c0_30 = arith.constant 0 : index
    %66 = vector.load %arg7[%c0_28, %c0_29, %c0_30] : memref<1x1x128xf32, #tpu.memory_space<vmem>>, vector<1x1x128xf32>
    tpu.vector_store %arg7[%c0_28, %c0_29, %c0_30], %65 {strides = array<i32>} : memref<1x1x128xf32, #tpu.memory_space<vmem>>, vector<1x1x128xf32>,
    %67 = tpu.iota {dimensions = array<i32: 1>} : vector<1x32xi32>
    %c12_i32 = arith.constant 12 : i32
    %68 = vector.broadcast %c12_i32 : i32 to vector<1x32xi32>
    %69 = arith.cmpi sge, %67, %68 : vector<1x32xi32>
    %c15_i32 = arith.constant 15 : i32
    %70 = vector.broadcast %c15_i32 : i32 to vector<1x32xi32>
    %71 = arith.cmpi slt, %67, %70 : vector<1x32xi32>
    %72 = arith.andi %69, %71 : vector<1x32xi1>
    %73 = arith.extui %72 : vector<1x32xi1> to vector<1x32xi32>
    %74 = arith.sitofp %73 : vector<1x32xi32> to vector<1x32xf32>
    %75 = arith.extf %3 : vector<256x32xbf16> to vector<256x32xf32>
    %76 = arith.extf %4 : vector<256x32xbf16> to vector<256x32xf32>
    %77 = arith.subf %75, %76 : vector<256x32xf32>
    %78 = math.absf %77 : vector<256x32xf32>
    %79 = vector.broadcast %74 : vector<1x32xf32> to vector<256x32xf32>
    %80 = arith.mulf %78, %79 : vector<256x32xf32>
    %c0_31 = arith.constant 0 : index
    %c0_32 = arith.constant 0 : index
    %c0_33 = arith.constant 0 : index
    %81 = vector.load %arg8[%c0_31, %c0_32, %c0_33] : memref<1x1x32xf32, #tpu.memory_space<vmem>>, vector<1x1x32xf32>
    %cst_34 = arith.constant dense<0.000000e+00> : vector<32xf32>
    %82 = vector.multi_reduction <add>, %80, %cst_34 [0] : vector<256x32xf32> to vector<32xf32>
    %83 = vector.shape_cast %82 : vector<32xf32> to vector<1x32xf32>
    %84 = vector.shape_cast %83 : vector<1x32xf32> to vector<1x1x32xf32>
    %85 = arith.addf %81, %84 : vector<1x1x32xf32>
    %c0_35 = arith.constant 0 : index
    %c0_36 = arith.constant 0 : index
    %c0_37 = arith.constant 0 : index
    %86 = vector.load %arg8[%c0_35, %c0_36, %c0_37] : memref<1x1x32xf32, #tpu.memory_space<vmem>>, vector<1x1x32xf32>
    tpu.vector_store %arg8[%c0_35, %c0_36, %c0_37], %85 {strides = array<i32>} : memref<1x1x32xf32, #tpu.memory_space<vmem>>, vector<1x1x32xf32>,
    return
  }
  func.func @transform_0(%arg0: i32, %arg1: i32) -> (i32, i32) {
    %c1_i32 = arith.constant 1 : i32
    %0 = arith.muli %arg0, %c1_i32 : i32
    %1 = arith.addi %0, %arg1 : i32
    %c0_i32 = arith.constant 0 : i32
    %c0_i32_0 = arith.constant 0 : i32
    return %1, %c0_i32 : i32, i32
  }
  func.func @transform_1(%arg0: i32, %arg1: i32) -> (i32, i32) {
    %c1_i32 = arith.constant 1 : i32
    %0 = arith.muli %arg0, %c1_i32 : i32
    %1 = arith.addi %0, %arg1 : i32
    %c0_i32 = arith.constant 0 : i32
    %c0_i32_0 = arith.constant 0 : i32
    return %1, %c0_i32 : i32, i32
  }
  func.func @transform_2(%arg0: i32, %arg1: i32) -> (i32, i32) {
    %c0_i32 = arith.constant 0 : i32
    %c0_i32_0 = arith.constant 0 : i32
    %c0_i32_1 = arith.constant 0 : i32
    return %c0_i32, %c0_i32_0 : i32, i32
  }
  func.func @transform_3(%arg0: i32, %arg1: i32) -> (i32, i32) {
    %c0_i32 = arith.constant 0 : i32
    %c0_i32_0 = arith.constant 0 : i32
    %c0_i32_1 = arith.constant 0 : i32
    return %c0_i32, %c0_i32_0 : i32, i32
  }
  func.func @transform_4(%arg0: i32, %arg1: i32) -> (i32, i32, i32) {
    %c0_i32 = arith.constant 0 : i32
    %c0_i32_0 = arith.constant 0 : i32
    %c0_i32_1 = arith.constant 0 : i32
    return %arg0, %c0_i32, %c0_i32_0 : i32, i32, i32
  }
  func.func @transform_5(%arg0: i32, %arg1: i32) -> (i32, i32, i32) {
    %c0_i32 = arith.constant 0 : i32
    %c0_i32_0 = arith.constant 0 : i32
    %c0_i32_1 = arith.constant 0 : i32
    return %arg0, %c0_i32, %c0_i32_0 : i32, i32, i32
  }
  func.func @transform_6(%arg0: i32, %arg1: i32) -> (i32, i32, i32) {
    %c0_i32 = arith.constant 0 : i32
    %c0_i32_0 = arith.constant 0 : i32
    %c0_i32_1 = arith.constant 0 : i32
    return %arg0, %c0_i32, %c0_i32_0 : i32, i32, i32
  }
}

</mosaic_0001>

<llo_original>
// kernel: tile.22
$region0: #{tile.22}
  #allocation0 [shape = 's32[1]{0}', space=sflag, size = 0x4, scoped, tag = 'scoped memory for tile.22']
  %s0 = inlined_call_operand.vmem [shape: f32[3], index: 0, kind: input, shape index: {}]
  %s1 = inlined_call_operand.vmem [shape: f32[9,3], index: 1, kind: output, shape index: {}]
  // Predicated region
  $region2: #{tile.22} parent=0 // pred_check
    _
  $region3: #{tile.22} parent=0 // pred_check_branch
    %3 = sbr.rel (0) target = $region5
  $region4: #{tile.22} parent=0 // pred_region
    _
  $region5: #{tile.22} parent=0 // pred_fallthru
    _
  %v4 = vld [vmem:[%s0] ss:$0 sm:$0xff]
  %5 = vst [vmem:[%s1] sm:$0xff] %v4
  %s6 = scalar_lea.vmem %s1, 8
  %7 = vst [vmem:[%s6] sm:$0xff] %v4

// kernel: div.14
$region0: #{div.14}
  %s0 = inlined_call_operand.vmem [shape: f32[9,3], index: 0, kind: input, shape index: {}]
  %s1 = inlined_call_operand.vmem [shape: f32[27], index: 1, kind: output, shape index: {}]
  $region1: #{div.14} parent=0
    #allocation0 [shape = 'u8[4096]{0}', space=vmem, size = 0x1000, scoped, tag = 'scoped mem for output reshape']
    %v2 = vld [vmem:[%s0] sm:$0x1]
    %vm3 = vcmask 23552
    %4 = vst.msk [vmem:[#allocation0] sm:$0x1] %vm3, %v2
    %s5 = scalar_lea.vmem %s0, 8
    %v6 = vld [vmem:[%s5] sm:$0x1]
    %7 = vrot.lane.b32.xlu0 %v6, 24
    %v8 = vpop.permute.xlu0 %7
    %vm9 = vcmask 220352
    %10 = vst.msk [vmem:[#allocation0] sm:$0x1] %vm9, %v8
    %s11 = scalar_lea.vmem %s0, 7
    %v12 = vld [vmem:[%s11] sm:$0x1]
    %13 = vrot.lane.b32.xlu0 %v12, 21
    %v14 = vpop.permute.xlu0 %13
    %vm15 = vcmask 195752
    %16 = vst.msk [vmem:[#allocation0] sm:$0x1] %vm15, %v14
    %s17 = scalar_lea.vmem %s0, 6
    %v18 = vld [vmem:[%s17] sm:$0x1]
    %19 = vrot.lane.b32.xlu0 %v18, 18
    %v20 = vpop.permute.xlu0 %19
    %vm21 = vcmask 171152
    %22 = vst.msk [vmem:[#allocation0] sm:$0x1] %vm21, %v20
    %s23 = scalar_lea.vmem %s0, 5
    %v24 = vld [vmem:[%s23] sm:$0x1]
    %25 = vrot.lane.b32.xlu0 %v24, 15
    %v26 = vpop.permute.xlu0 %25
    %vm27 = vcmask 146552
    %28 = vst.msk [vmem:[#allocation0] sm:$0x1] %vm27, %v26
    %s29 = scalar_lea.vmem %s0, 4
    %v30 = vld [vmem:[%s29] sm:$0x1]
    %31 = vrot.lane.b32.xlu0 %v30, 12
    %v32 = vpop.permute.xlu0 %31
    %vm33 = vcmask 121952
    %34 = vst.msk [vmem:[#allocation0] sm:$0x1] %vm33, %v32
    %s35 = scalar_lea.vmem %s0, 3
    %v36 = vld [vmem:[%s35] sm:$0x1]
    %37 = vrot.lane.b32.xlu0 %v36, 9
    %v38 = vpop.permute.xlu0 %37
    %vm39 = vcmask 97352
    %40 = vst.msk [vmem:[#allocation0] sm:$0x1] %vm39, %v38
    %s41 = scalar_lea.vmem %s0, 2
    %v42 = vld [vmem:[%s41] sm:$0x1]
    %43 = vrot.lane.b32.xlu0 %v42, 6
    %v44 = vpop.permute.xlu0 %43
    %vm45 = vcmask 72752
    %46 = vst.msk [vmem:[#allocation0] sm:$0x1] %vm45, %v44
    %s47 = scalar_lea.vmem %s0, 1
    %v48 = vld [vmem:[%s47] sm:$0x1]
    %49 = vrot.lane.b32.xlu0 %v48, 3
    %v50 = vpop.permute.xlu0 %49
    %vm51 = vcmask 48152
    %52 = vst.msk [vmem:[#allocation0] sm:$0x1] %vm51, %v50
    %s54 = sshllo.u32 0, 1
    %v56 = vld [vmem:[#allocation0] sm:%s54]
    %s57 = sshllo.u32 0, 1
    %58 = vst [vmem:[%s1] sm:%s57] %v56

// kernel: gradnorm_loss.1
$region0: #{gradnorm_loss.1}
  #allocation0 [shape = 'u32[]', space=smem, size = 0x4, offset = 0x4, fixed_abs, tag = 'smem constant byte address 0x4 - core index']
  #allocation1 [shape = 'u32[144,128]{1,0:T(1,128)}', space=vmem, size = 0x12000, scoped, tag = 'internal scratch']
  %s0 = inlined_call_operand.vmem [shape: bf16[512,32], index: 0, kind: input, shape index: {}]
  %s1 = inlined_call_operand.vmem [shape: bf16[512,32], index: 1, kind: input, shape index: {}]
  %s2 = inlined_call_operand.vmem [shape: bf16[32,128], index: 2, kind: input, shape index: {}]
  %s3 = inlined_call_operand.vmem [shape: f32[8,128], index: 3, kind: input, shape index: {}]
  %s4 = inlined_call_operand.vmem [shape: f32[2,1,128], index: 4, kind: output, shape index: {0}]
  %s5 = inlined_call_operand.vmem [shape: f32[2,1,128], index: 5, kind: output, shape index: {1}]
  %s6 = inlined_call_operand.vmem [shape: f32[2,1,32], index: 6, kind: output, shape index: {2}]
  %7 = xla_tuple %s4, %s5, %s6
  %s8 = sld [smem:[#allocation0]]
  $region69: #{gradnorm_loss.1} parent=0
    _
  %s10 = ssub.s32 1, %s8
  %s11 = scalar_select 0, %s10, %s8
  loop: start=0, step=1, limit=4
  $region2: #{gradnorm_loss.1} parent=0 // loop_pre_header
    _
  $region3: #{gradnorm_loss.1} parent=0 // loop_header
    %s13 = sphi 0, %s17
    %p14 = scmp.ge.s32.totalorder %s13, 4
    %s20 = sphi 0, %s32
    %s21 = sphi 0, %s28
    %s22 = sphi 0, %s20
    %s23 = sphi 0, %s21
    %s24 = sphi 0, %s22
    %s25 = sphi 0, %s23
    %s37 = sphi 0, %s39
    %s40 = sphi 0, %s37
    %s41 = sphi 0, %s40
    %s57 = sphi 0, %s41
    %s65 = sphi 0, %s67
    %s68 = sphi 0, %s65
    %s69 = sphi 0, %s68
    %s85 = sphi 0, %s69
    %s89 = sphi 0, %s89
    %s91 = sphi 0, %s89
    %s92 = sphi 0, %s91
    %s106 = sphi 0, %s92
    %s110 = sphi 0, %s110
    %s112 = sphi 0, %s110
    %s113 = sphi 0, %s112
    %s127 = sphi 0, %s113
    %s133 = sphi 0, %s135
    %s136 = sphi 0, %s133
    %s137 = sphi 0, %s136
    %s153 = sphi 0, %s137
    %s159 = sphi 0, %s161
    %s162 = sphi 0, %s159
    %s163 = sphi 0, %s162
    %s179 = sphi 0, %s163
    %s185 = sphi 0, %s187
    %s188 = sphi 0, %s185
    %s189 = sphi 0, %s188
    %s205 = sphi 0, %s189
  $region4: #{gradnorm_loss.1} parent=0 // loop_header_branch
    %16 = sbr.rel (%p14) target = $region8
  $region5: #{gradnorm_loss.1} parent=0 // loop_body
    %s18 = ssub.s32 %s13, 1
    %s19 = ssub.s32 %s13, 2
    %s26 = sadd.s32 1, %s21
    %p27 = scmp.ge.s32.totalorder %s26, 1
    %s28 = scalar_select %p27, 0, %s26
    %s29 = sadd.s32 1, %s20
    %s30 = scalar_select %p27, %s29, %s20
    %p31 = scmp.ge.s32.totalorder %s30, 2
    %s32 = scalar_select %p31, 0, %s30
    %s33 = sadd.s32 %s20, %s21
    %s34 = sadd.s32 %s32, %s28
    %s35 = ssub.s32 %s33, %s34
    %p36 = scmp.eq.s32.totalorder %s35, 0
    %s38 = sadd.s32 %s37, 1
    %s39 = scalar_select %p36, %s37, %s38
    %p42 = pneg %p36
    %p43 = scmp.eq.s32.totalorder %s13, 1
    %p44 = por %p42, %p43
    %p45 = scmp.ne.s32.totalorder %s37, %s40
    %p46 = scmp.eq.s32.totalorder %s13, 0
    %p47 = por %p45, %p46
    %p48 = scmp.ne.s32.totalorder %s37, %s40
    %p49 = scmp.eq.s32.totalorder %s18, 1
    %p50 = por %p48, %p49
    %p51 = scmp.ne.s32.totalorder %s40, %s41
    %p52 = scmp.eq.s32.totalorder %s18, 0
    %p53 = por %p51, %p52
    %p54 = scmp.ne.s32.totalorder %s40, %s41
    %p55 = scmp.eq.s32.totalorder %s19, 1
    %p56 = por %p54, %p55
    %p58 = scmp.ne.s32.totalorder %s41, %s57
    %p59 = scmp.eq.s32.totalorder %s19, 0
    %p60 = por %p58, %p59
    %s61 = sadd.s32 %s20, %s21
    %s62 = sadd.s32 %s32, %s28
    %s63 = ssub.s32 %s61, %s62
    %p64 = scmp.eq.s32.totalorder %s63, 0
    %s66 = sadd.s32 %s65, 1
    %s67 = scalar_select %p64, %s65, %s66
    %p70 = pneg %p64
    %p71 = scmp.eq.s32.totalorder %s13, 1
    %p72 = por %p70, %p71
    %p73 = scmp.ne.s32.totalorder %s65, %s68
    %p74 = scmp.eq.s32.totalorder %s13, 0
    %p75 = por %p73, %p74
    %p76 = scmp.ne.s32.totalorder %s65, %s68
    %p77 = scmp.eq.s32.totalorder %s18, 1
    %p78 = por %p76, %p77
    %p79 = scmp.ne.s32.totalorder %s68, %s69
    %p80 = scmp.eq.s32.totalorder %s18, 0
    %p81 = por %p79, %p80
    %p82 = scmp.ne.s32.totalorder %s68, %s69
    %p83 = scmp.eq.s32.totalorder %s19, 1
    %p84 = por %p82, %p83
    %p86 = scmp.ne.s32.totalorder %s69, %s85
    %p87 = scmp.eq.s32.totalorder %s19, 0
    %p88 = por %p86, %p87
    %s90 = sadd.s32 %s89, 1
    %p93 = scmp.eq.s32.totalorder %s13, 1
    %p94 = scmp.ne.s32.totalorder %s89, %s91
    %p95 = scmp.eq.s32.totalorder %s13, 0
    %p96 = por %p94, %p95
    %p97 = scmp.ne.s32.totalorder %s89, %s91
    %p98 = scmp.eq.s32.totalorder %s18, 1
    %p99 = por %p97, %p98
    %p100 = scmp.ne.s32.totalorder %s91, %s92
    %p101 = scmp.eq.s32.totalorder %s18, 0
    %p102 = por %p100, %p101
    %p103 = scmp.ne.s32.totalorder %s91, %s92
    %p104 = scmp.eq.s32.totalorder %s19, 1
    %p105 = por %p103, %p104
    %p107 = scmp.ne.s32.totalorder %s92, %s106
    %p108 = scmp.eq.s32.totalorder %s19, 0
    %p109 = por %p107, %p108
    %s111 = sadd.s32 %s110, 1
    %p114 = scmp.eq.s32.totalorder %s13, 1
    %p115 = scmp.ne.s32.totalorder %s110, %s112
    %p116 = scmp.eq.s32.totalorder %s13, 0
    %p117 = por %p115, %p116
    %p118 = scmp.ne.s32.totalorder %s110, %s112
    %p119 = scmp.eq.s32.totalorder %s18, 1
    %p120 = por %p118, %p119
    %p121 = scmp.ne.s32.totalorder %s112, %s113
    %p122 = scmp.eq.s32.totalorder %s18, 0
    %p123 = por %p121, %p122
    %p124 = scmp.ne.s32.totalorder %s112, %s113
    %p125 = scmp.eq.s32.totalorder %s19, 1
    %p126 = por %p124, %p125
    %p128 = scmp.ne.s32.totalorder %s113, %s127
    %p129 = scmp.eq.s32.totalorder %s19, 0
    %p130 = por %p128, %p129
    %s131 = ssub.s32 %s20, %s32
    %p132 = scmp.eq.s32.totalorder %s131, 0
    %s134 = sadd.s32 %s133, 1
    %s135 = scalar_select %p132, %s133, %s134
    %p138 = pneg %p132
    %p139 = scmp.eq.s32.totalorder %s13, 1
    %p140 = por %p138, %p139
    %p141 = scmp.ne.s32.totalorder %s133, %s136
    %p142 = scmp.eq.s32.totalorder %s13, 0
    %p143 = por %p141, %p142
    %p144 = scmp.ne.s32.totalorder %s133, %s136
    %p145 = scmp.eq.s32.totalorder %s18, 1
    %p146 = por %p144, %p145
    %p147 = scmp.ne.s32.totalorder %s136, %s137
    %p148 = scmp.eq.s32.totalorder %s18, 0
    %p149 = por %p147, %p148
    %p150 = scmp.ne.s32.totalorder %s136, %s137
    %p151 = scmp.eq.s32.totalorder %s19, 1
    %p152 = por %p150, %p151
    %p154 = scmp.ne.s32.totalorder %s137, %s153
    %p155 = scmp.eq.s32.totalorder %s19, 0
    %p156 = por %p154, %p155
    %s157 = ssub.s32 %s20, %s32
    %p158 = scmp.eq.s32.totalorder %s157, 0
    %s160 = sadd.s32 %s159, 1
    %s161 = scalar_select %p158, %s159, %s160
    %p164 = pneg %p158
    %p165 = scmp.eq.s32.totalorder %s13, 1
    %p166 = por %p164, %p165
    %p167 = scmp.ne.s32.totalorder %s159, %s162
    %p168 = scmp.eq.s32.totalorder %s13, 0
    %p169 = por %p167, %p168
    %p170 = scmp.ne.s32.totalorder %s159, %s162
    %p171 = scmp.eq.s32.totalorder %s18, 1
    %p172 = por %p170, %p171
    %p173 = scmp.ne.s32.totalorder %s162, %s163
    %p174 = scmp.eq.s32.totalorder %s18, 0
    %p175 = por %p173, %p174
    %p176 = scmp.ne.s32.totalorder %s162, %s163
    %p177 = scmp.eq.s32.totalorder %s19, 1
    %p178 = por %p176, %p177
    %p180 = scmp.ne.s32.totalorder %s163, %s179
    %p181 = scmp.eq.s32.totalorder %s19, 0
    %p182 = por %p180, %p181
    %s183 = ssub.s32 %s20, %s32
    %p184 = scmp.eq.s32.totalorder %s183, 0
    %s186 = sadd.s32 %s185, 1
    %s187 = scalar_select %p184, %s185, %s186
    %p190 = pneg %p184
    %p191 = scmp.eq.s32.totalorder %s13, 1
    %p192 = por %p190, %p191
    %p193 = scmp.ne.s32.totalorder %s185, %s188
    %p194 = scmp.eq.s32.totalorder %s13, 0
    %p195 = por %p193, %p194
    %p196 = scmp.ne.s32.totalorder %s185, %s188
    %p197 = scmp.eq.s32.totalorder %s18, 1
    %p198 = por %p196, %p197
    %p199 = scmp.ne.s32.totalorder %s188, %s189
    %p200 = scmp.eq.s32.totalorder %s18, 0
    %p201 = por %p199, %p200
    %p202 = scmp.ne.s32.totalorder %s188, %s189
    %p203 = scmp.eq.s32.totalorder %s19, 1
    %p204 = por %p202, %p203
    %p206 = scmp.ne.s32.totalorder %s189, %s205
    %p207 = scmp.eq.s32.totalorder %s19, 0
    %p208 = por %p206, %p207
    %p209 = scmp.le.s32.totalorder 1, %s13
    %p210 = scmp.lt.s32.totalorder %s13, 3
    %p211 = pnand %p209, %p210
    %p212 = pneg %p211
    // Predicated region
    $region9: #{gradnorm_loss.1} parent=5 // pred_check
      _
    $region10: #{gradnorm_loss.1} parent=5 // pred_check_branch
      %214 = sbr.rel (%p211) target = $region12
    $region11: #{gradnorm_loss.1} parent=5 // pred_region
      %s215 = ssub.s32 %s13, 1
      // Predicated region
      $region13: #{gradnorm_loss.1} parent=11 // pred_check
        %p216 = pneg %p102
      $region14: #{gradnorm_loss.1} parent=11 // pred_check_branch
        %218 = sbr.rel (%p216) target = $region16
      $region15: #{gradnorm_loss.1} parent=11 // pred_region
        _
      $region16: #{gradnorm_loss.1} parent=11 // pred_fallthru
        _
      // Predicated region
      $region17: #{gradnorm_loss.1} parent=11 // pred_check
        %p219 = pneg %p123
      $region18: #{gradnorm_loss.1} parent=11 // pred_check_branch
        %221 = sbr.rel (%p219) target = $region20
      $region19: #{gradnorm_loss.1} parent=11 // pred_region
        _
      $region20: #{gradnorm_loss.1} parent=11 // pred_fallthru
        _
    $region12: #{gradnorm_loss.1} parent=5 // pred_fallthru
      _
    %p222 = scmp.lt.s32.totalorder %s13, 2
    // Predicated region
    $region21: #{gradnorm_loss.1} parent=5 // pred_check
      %p223 = pneg %p222
    $region22: #{gradnorm_loss.1} parent=5 // pred_check_branch
      %225 = sbr.rel (%p223) target = $region24
    $region23: #{gradnorm_loss.1} parent=5 // pred_region
      // Predicated region
      $region25: #{gradnorm_loss.1} parent=23 // pred_check
        %p226 = pneg %p47
      $region26: #{gradnorm_loss.1} parent=23 // pred_check_branch
        %228 = sbr.rel (%p226) target = $region28
      $region27: #{gradnorm_loss.1} parent=23 // pred_region
        %s229 = sadd.s32 %s20, %s21
        %s230 = smul.u32 32, %s229
        %p231 = scmp.lt.s32.totalorder %s230, 63
        %s232 = scalar_select %p231, %s230, 63
        %s233 = smul.addr %s232, 4
        %s234 = scalar_lea.vmem %s0, %s233
        %s235 = sadd.s32 %s20, %s21
        %s236 = smul.u32 32, %s235
      $region28: #{gradnorm_loss.1} parent=23 // pred_fallthru
        _
      // Predicated region
      $region29: #{gradnorm_loss.1} parent=23 // pred_check
        %p237 = pneg %p75
      $region30: #{gradnorm_loss.1} parent=23 // pred_check_branch
        %239 = sbr.rel (%p237) target = $region32
      $region31: #{gradnorm_loss.1} parent=23 // pred_region
        %s240 = sadd.s32 %s20, %s21
        %s241 = smul.u32 32, %s240
        %p242 = scmp.lt.s32.totalorder %s241, 63
        %s243 = scalar_select %p242, %s241, 63
        %s244 = smul.addr %s243, 4
        %s245 = scalar_lea.vmem %s1, %s244
        %s246 = sadd.s32 %s20, %s21
        %s247 = smul.u32 32, %s246
      $region32: #{gradnorm_loss.1} parent=23 // pred_fallthru
        _
    $region24: #{gradnorm_loss.1} parent=5 // pred_fallthru
      _
    %p248 = scmp.le.s32.totalorder 1, %s13
    %p249 = scmp.lt.s32.totalorder %s13, 3
    %p250 = pnand %p248, %p249
    %p251 = pneg %p250
    // Predicated region
    $region33: #{gradnorm_loss.1} parent=5 // pred_check
      _
    $region34: #{gradnorm_loss.1} parent=5 // pred_check_branch
      %253 = sbr.rel (%p250) target = $region36
    $region35: #{gradnorm_loss.1} parent=5 // pred_region
      %s254 = ssub.s32 %s13, 1
      %s255 = sadd.s32 %s22, %s23
      %s256 = smul.u32 32, %s255
      %p257 = scmp.lt.s32.totalorder %s256, 63
      %s258 = scalar_select %p257, %s256, 63
      %s259 = smul.addr %s258, 4
      %s260 = scalar_lea.vmem %s0, %s259
      %p261 = pneg %p53
      %p262 = pneg %p50
      %s263 = sadd.s32 %s22, %s23
      %s264 = smul.u32 32, %s263
      %p265 = scmp.lt.s32.totalorder %s264, 63
      %s266 = scalar_select %p265, %s264, 63
      %s267 = smul.addr %s266, 4
      %s268 = scalar_lea.vmem %s1, %s267
      %p269 = pneg %p81
      %p270 = pneg %p78
      %p271 = pneg %p102
      %p272 = pneg %p99
      %p273 = pneg %p123
      %p274 = pneg %p120
      %p275 = pneg %p149
      %p276 = pneg %p146
      %p277 = scmp.lt.s32.totalorder %s22, 1
      %s278 = scalar_select %p277, %s22, 1
      %s279 = scalar_lea.vmem %s4, %s278
      %p280 = pneg %p175
      %p281 = pneg %p172
      %p282 = scmp.lt.s32.totalorder %s22, 1
      %s283 = scalar_select %p282, %s22, 1
      %s284 = scalar_lea.vmem %s5, %s283
      %p285 = pneg %p201
      %p286 = pneg %p198
      %p287 = scmp.lt.s32.totalorder %s22, 1
      %s288 = scalar_select %p287, %s22, 1
      %s289 = scalar_lea.vmem %s6, %s288
      %s290 = sadd.s32 %s22, %s23
      %s291 = smul.u32 32, %s290
      %p292 = scmp.lt.s32.totalorder %s291, 63
      %s293 = scalar_select %p292, %s291, 63
      %s294 = smul.addr %s293, 4
      %s295 = scalar_lea.vmem %s0, %s294
      %s296 = sadd.s32 %s22, %s23
      %s297 = smul.u32 32, %s296
      %s298 = sadd.s32 %s22, %s23
      %s299 = smul.u32 32, %s298
      %p300 = scmp.lt.s32.totalorder %s299, 63
      %s301 = scalar_select %p300, %s299, 63
      %s302 = smul.addr %s301, 4
      %s303 = scalar_lea.vmem %s1, %s302
      %s304 = sadd.s32 %s22, %s23
      %s305 = smul.u32 32, %s304
      %p306 = scmp.lt.s32.totalorder %s22, 1
      %s307 = scalar_select %p306, %s22, 1
      %s308 = scalar_lea.vmem %s4, %s307
      %p309 = scmp.lt.s32.totalorder %s22, 1
      %s310 = scalar_select %p309, %s22, 1
      %s311 = scalar_lea.vmem %s5, %s310
      %p312 = scmp.lt.s32.totalorder %s22, 1
      %s313 = scalar_select %p312, %s22, 1
      %s314 = scalar_lea.vmem %s6, %s313
      %p316 = scmp.eq.s32.totalorder %s23, 0
      // Predicated region
      $region37: #{gradnorm_loss.1} parent=35 // pred_check
        %p317 = pneg %p316
      $region38: #{gradnorm_loss.1} parent=35 // pred_check_branch
        %319 = sbr.rel (%p317) target = $region40
      $region39: #{gradnorm_loss.1} parent=35 // pred_region
        %320 = vst [vmem:[%s308] sm:$0x1] 0.0
        %321 = vst [vmem:[%s311] sm:$0x1] 0.0
        %vm322 = vcmask 253952
        %323 = vst.msk [vmem:[%s314] sm:$0x1] %vm322, 0.0
      $region40: #{gradnorm_loss.1} parent=35 // pred_fallthru
        _
      %v324 = vld [vmem:[%s295] sm:$0xf]
      %v325 = vld [vmem:[%s295 + $0x4] sm:$0xf]
      %v326 = vld [vmem:[%s295 + $0x8] sm:$0xf]
      %v327 = vld [vmem:[%s295 + $0xc] sm:$0xf]
      %v328 = vld [vmem:[%s295 + $0x10] sm:$0xf]
      %v329 = vld [vmem:[%s295 + $0x14] sm:$0xf]
      %v330 = vld [vmem:[%s295 + $0x18] sm:$0xf]
      %v331 = vld [vmem:[%s295 + $0x1c] sm:$0xf]
      %v332 = vld [vmem:[%s295 + $0x20] sm:$0xf]
      %v333 = vld [vmem:[%s295 + $0x24] sm:$0xf]
      %v334 = vld [vmem:[%s295 + $0x28] sm:$0xf]
      %v335 = vld [vmem:[%s295 + $0x2c] sm:$0xf]
      %v336 = vld [vmem:[%s295 + $0x30] sm:$0xf]
      %v337 = vld [vmem:[%s295 + $0x34] sm:$0xf]
      %v338 = vld [vmem:[%s295 + $0x38] sm:$0xf]
      %v339 = vld [vmem:[%s295 + $0x3c] sm:$0xf]
      %v340 = vld [vmem:[%s295 + $0x40] sm:$0xf]
      %v341 = vld [vmem:[%s295 + $0x44] sm:$0xf]
      %v342 = vld [vmem:[%s295 + $0x48] sm:$0xf]
      %v343 = vld [vmem:[%s295 + $0x4c] sm:$0xf]
      %v344 = vld [vmem:[%s295 + $0x50] sm:$0xf]
      %v345 = vld [vmem:[%s295 + $0x54] sm:$0xf]
      %v346 = vld [vmem:[%s295 + $0x58] sm:$0xf]
      %v347 = vld [vmem:[%s295 + $0x5c] sm:$0xf]
      %v348 = vld [vmem:[%s295 + $0x60] sm:$0xf]
      %v349 = vld [vmem:[%s295 + $0x64] sm:$0xf]
      %v350 = vld [vmem:[%s295 + $0x68] sm:$0xf]
      %v351 = vld [vmem:[%s295 + $0x6c] sm:$0xf]
      %v352 = vld [vmem:[%s295 + $0x70] sm:$0xf]
      %v353 = vld [vmem:[%s295 + $0x74] sm:$0xf]
      %v354 = vld [vmem:[%s295 + $0x78] sm:$0xf]
      %v355 = vld [vmem:[%s295 + $0x7c] sm:$0xf]
      %v356 = vld [vmem:[%s303] sm:$0xf]
      %v357 = vld [vmem:[%s303 + $0x4] sm:$0xf]
      %v358 = vld [vmem:[%s303 + $0x8] sm:$0xf]
      %v359 = vld [vmem:[%s303 + $0xc] sm:$0xf]
      %v360 = vld [vmem:[%s303 + $0x10] sm:$0xf]
      %v361 = vld [vmem:[%s303 + $0x14] sm:$0xf]
      %v362 = vld [vmem:[%s303 + $0x18] sm:$0xf]
      %v363 = vld [vmem:[%s303 + $0x1c] sm:$0xf]
      %v364 = vld [vmem:[%s303 + $0x20] sm:$0xf]
      %v365 = vld [vmem:[%s303 + $0x24] sm:$0xf]
      %v366 = vld [vmem:[%s303 + $0x28] sm:$0xf]
      %v367 = vld [vmem:[%s303 + $0x2c] sm:$0xf]
      %v368 = vld [vmem:[%s303 + $0x30] sm:$0xf]
      %v369 = vld [vmem:[%s303 + $0x34] sm:$0xf]
      %v370 = vld [vmem:[%s303 + $0x38] sm:$0xf]
      %v371 = vld [vmem:[%s303 + $0x3c] sm:$0xf]
      %v372 = vld [vmem:[%s303 + $0x40] sm:$0xf]
      %v373 = vld [vmem:[%s303 + $0x44] sm:$0xf]
      %v374 = vld [vmem:[%s303 + $0x48] sm:$0xf]
      %v375 = vld [vmem:[%s303 + $0x4c] sm:$0xf]
      %v376 = vld [vmem:[%s303 + $0x50] sm:$0xf]
      %v377 = vld [vmem:[%s303 + $0x54] sm:$0xf]
      %v378 = vld [vmem:[%s303 + $0x58] sm:$0xf]
      %v379 = vld [vmem:[%s303 + $0x5c] sm:$0xf]
      %v380 = vld [vmem:[%s303 + $0x60] sm:$0xf]
      %v381 = vld [vmem:[%s303 + $0x64] sm:$0xf]
      %v382 = vld [vmem:[%s303 + $0x68] sm:$0xf]
      %v383 = vld [vmem:[%s303 + $0x6c] sm:$0xf]
      %v384 = vld [vmem:[%s303 + $0x70] sm:$0xf]
      %v385 = vld [vmem:[%s303 + $0x74] sm:$0xf]
      %v386 = vld [vmem:[%s303 + $0x78] sm:$0xf]
      %v387 = vld [vmem:[%s303 + $0x7c] sm:$0xf]
      %v388 = vld [vmem:[%s2] sm:$0xf]
      %v389 = vld [vmem:[%s2 + $0x4] sm:$0xf]
      %v390 = vld [vmem:[%s2 + $0x8] sm:$0xf]
      %v391 = vld [vmem:[%s2 + $0xc] sm:$0xf]
      %v392 = vld [vmem:[%s3] sm:$0x1]
      %v393 = vld [vmem:[%s3 + $0x1] sm:$0x1]
      %v394 = vlaneseq
      %v395 = vshrl.u32 %v394, 7
      %v396 = vsub.s32 0, %v395
      %v397 = vrot.slane %v392, %v396
      %v430 = vunpack.c.l.b16 %v324
      %v431 = vunpack.c.l.b16 %v325
      %v432 = vunpack.c.l.b16 %v326
      %v433 = vunpack.c.l.b16 %v327
      %v434 = vunpack.c.l.b16 %v328
      %v435 = vunpack.c.l.b16 %v329
      %v436 = vunpack.c.l.b16 %v330
      %v437 = vunpack.c.l.b16 %v331
      %v438 = vunpack.c.l.b16 %v332
      %v439 = vunpack.c.l.b16 %v333
      %v440 = vunpack.c.l.b16 %v334
      %v441 = vunpack.c.l.b16 %v335
      %v442 = vunpack.c.l.b16 %v336
      %v443 = vunpack.c.l.b16 %v337
      %v444 = vunpack.c.l.b16 %v338
      %v445 = vunpack.c.l.b16 %v339
      %v446 = vunpack.c.l.b16 %v340
      %v447 = vunpack.c.l.b16 %v341
      %v448 = vunpack.c.l.b16 %v342
      %v449 = vunpack.c.l.b16 %v343
      %v450 = vunpack.c.l.b16 %v344
      %v451 = vunpack.c.l.b16 %v345
      %v452 = vunpack.c.l.b16 %v346
      %v453 = vunpack.c.l.b16 %v347
      %v454 = vunpack.c.l.b16 %v348
      %v455 = vunpack.c.l.b16 %v349
      %v456 = vunpack.c.l.b16 %v350
      %v457 = vunpack.c.l.b16 %v351
      %v458 = vunpack.c.l.b16 %v352
      %v459 = vunpack.c.l.b16 %v353
      %v460 = vunpack.c.l.b16 %v354
      %v461 = vunpack.c.l.b16 %v355
      %v462 = vpack.c.b16 %v431, %v430
      %v463 = vpack.c.b16 %v433, %v432
      %v464 = vpack.c.b16 %v435, %v434
      %v465 = vpack.c.b16 %v437, %v436
      %v466 = vpack.c.b16 %v439, %v438
      %v467 = vpack.c.b16 %v441, %v440
      %v468 = vpack.c.b16 %v443, %v442
      %v469 = vpack.c.b16 %v445, %v444
      %v470 = vpack.c.b16 %v447, %v446
      %v471 = vpack.c.b16 %v449, %v448
      %v472 = vpack.c.b16 %v451, %v450
      %v473 = vpack.c.b16 %v453, %v452
      %v474 = vpack.c.b16 %v455, %v454
      %v475 = vpack.c.b16 %v457, %v456
      %v476 = vpack.c.b16 %v459, %v458
      %v477 = vpack.c.b16 %v461, %v460
      %v482 = vunpack.c.l.b16 %v388
      %v483 = vunpack.c.l.b16 %v389
      %v484 = vunpack.c.l.b16 %v390
      %v485 = vunpack.c.l.b16 %v391
      %v486 = vpack.c.b16 %v483, %v482
      %v487 = vpack.c.b16 %v485, %v484
      %vm490 = vcmask 261120
      %v492 = vsel %vm490, %v462, 0
      %v495 = vsel %vm490, %v463, 0
      %v498 = vsel %vm490, %v464, 0
      %v501 = vsel %vm490, %v465, 0
      %v504 = vsel %vm490, %v466, 0
      %v507 = vsel %vm490, %v467, 0
      %v510 = vsel %vm490, %v468, 0
      %v513 = vsel %vm490, %v469, 0
      %v516 = vsel %vm490, %v470, 0
      %v519 = vsel %vm490, %v471, 0
      %v522 = vsel %vm490, %v472, 0
      %v525 = vsel %vm490, %v473, 0
      %v528 = vsel %vm490, %v474, 0
      %v531 = vsel %vm490, %v475, 0
      %v534 = vsel %vm490, %v476, 0
      %v537 = vsel %vm490, %v477, 0
      %539 = vmatprep.subr.bf16.mxu0 0
      %540 = vmatpush1.bf16.msra.mxu0 %v486
      %541 = vmatprep.subr.bf16.mxu0 0
      %542 = vmatpush1.bf16.msra.mxu0 %v487
      %543 = vmatprep.subr.bf16.mxu0 0
      %544 = vmatpush1.bf16.msra.mxu0 0
      %545 = vmatprep.subr.bf16.mxu0 0
      %546 = vmatpush1.bf16.msra.mxu0 0
      %547 = vmatprep.subr.bf16.mxu0 0
      %548 = vmatpush1.bf16.msra.mxu0 0
      %549 = vmatprep.subr.bf16.mxu0 0
      %550 = vmatpush1.bf16.msra.mxu0 0
      %551 = vmatprep.subr.bf16.mxu0 0
      %552 = vmatpush1.bf16.msra.mxu0 0
      %553 = vmatprep.subr.bf16.mxu0 0
      %554 = vmatpush1.bf16.msra.mxu0 0
      %555 = vmatprep.subr.bf16.mxu0 0
      %556 = vmatpush1.bf16.msra.mxu0 0
      %557 = vmatprep.subr.bf16.mxu0 0
      %558 = vmatpush1.bf16.msra.mxu0 0
      %559 = vmatprep.subr.bf16.mxu0 0
      %560 = vmatpush1.bf16.msra.mxu0 0
      %561 = vmatprep.subr.bf16.mxu0 0
      %562 = vmatpush1.bf16.msra.mxu0 0
      %563 = vmatprep.subr.bf16.mxu0 0
      %564 = vmatpush1.bf16.msra.mxu0 0
      %565 = vmatprep.subr.bf16.mxu0 0
      %566 = vmatpush1.bf16.msra.mxu0 0
      %567 = vmatprep.subr.bf16.mxu0 0
      %568 = vmatpush1.bf16.msra.mxu0 0
      %569 = vmatprep.subr.bf16.mxu0 0
      %570 = vmatpush1.bf16.msra.mxu0 0
      %571 = vmatprep.mubr.bf16.mxu0 0
      %572 = vmatmul.mubr.bf16.gmra.mrb[0].mxu0 %v492
      %v573 = vpop.f32.mrb[0].mxu0
      %v574 = vadd.f32 %v397, %v573
      %v575 = vpop.f32.mrb[0].mxu0
      %v576 = vpop.f32.mrb[0].mxu0
      %v577 = vadd.f32 %v397, %v576
      %v578 = vpop.f32.mrb[0].mxu0
      %579 = vmatprep.mubr.bf16.mxu0 0
      %580 = vmatmul.mubr.bf16.gmra.mrb[0].mxu0 %v495
      %v581 = vpop.f32.mrb[0].mxu0
      %v582 = vadd.f32 %v397, %v581
      %v583 = vpop.f32.mrb[0].mxu0
      %v584 = vpop.f32.mrb[0].mxu0
      %v585 = vadd.f32 %v397, %v584
      %v586 = vpop.f32.mrb[0].mxu0
      %587 = vmatprep.mubr.bf16.mxu0 0
      %588 = vmatmul.mubr.bf16.gmra.mrb[0].mxu0 %v498
      %v589 = vpop.f32.mrb[0].mxu0
      %v590 = vadd.f32 %v397, %v589
      %v591 = vpop.f32.mrb[0].mxu0
      %v592 = vpop.f32.mrb[0].mxu0
      %v593 = vadd.f32 %v397, %v592
      %v594 = vpop.f32.mrb[0].mxu0
      %595 = vmatprep.mubr.bf16.mxu0 0
      %596 = vmatmul.mubr.bf16.gmra.mrb[0].mxu0 %v501
      %v597 = vpop.f32.mrb[0].mxu0
      %v598 = vadd.f32 %v397, %v597
      %v599 = vpop.f32.mrb[0].mxu0
      %v600 = vpop.f32.mrb[0].mxu0
      %v601 = vadd.f32 %v397, %v600
      %v602 = vpop.f32.mrb[0].mxu0
      %603 = vmatprep.mubr.bf16.mxu0 0
      %604 = vmatmul.mubr.bf16.gmra.mrb[0].mxu0 %v504
      %v605 = vpop.f32.mrb[0].mxu0
      %v606 = vadd.f32 %v397, %v605
      %v607 = vpop.f32.mrb[0].mxu0
      %v608 = vpop.f32.mrb[0].mxu0
      %v609 = vadd.f32 %v397, %v608
      %v610 = vpop.f32.mrb[0].mxu0
      %611 = vmatprep.mubr.bf16.mxu0 0
      %612 = vmatmul.mubr.bf16.gmra.mrb[0].mxu0 %v507
      %v613 = vpop.f32.mrb[0].mxu0
      %v614 = vadd.f32 %v397, %v613
      %v615 = vpop.f32.mrb[0].mxu0
      %v616 = vpop.f32.mrb[0].mxu0
      %v617 = vadd.f32 %v397, %v616
      %v618 = vpop.f32.mrb[0].mxu0
      %619 = vmatprep.mubr.bf16.mxu0 0
      %620 = vmatmul.mubr.bf16.gmra.mrb[0].mxu0 %v510
      %v621 = vpop.f32.mrb[0].mxu0
      %v622 = vadd.f32 %v397, %v621
      %v623 = vpop.f32.mrb[0].mxu0
      %v624 = vpop.f32.mrb[0].mxu0
      %v625 = vadd.f32 %v397, %v624
      %v626 = vpop.f32.mrb[0].mxu0
      %627 = vmatprep.mubr.bf16.mxu0 0
      %628 = vmatmul.mubr.bf16.gmra.mrb[0].mxu0 %v513
      %v629 = vpop.f32.mrb[0].mxu0
      %v630 = vadd.f32 %v397, %v629
      %v631 = vpop.f32.mrb[0].mxu0
      %v632 = vpop.f32.mrb[0].mxu0
      %v633 = vadd.f32 %v397, %v632
      %v634 = vpop.f32.mrb[0].mxu0
      %635 = vmatprep.mubr.bf16.mxu0 0
      %636 = vmatmul.mubr.bf16.gmra.mrb[0].mxu0 %v516
      %v637 = vpop.f32.mrb[0].mxu0
      %v638 = vadd.f32 %v397, %v637
      %v639 = vpop.f32.mrb[0].mxu0
      %v640 = vpop.f32.mrb[0].mxu0
      %v641 = vadd.f32 %v397, %v640
      %v642 = vpop.f32.mrb[0].mxu0
      %643 = vmatprep.mubr.bf16.mxu0 0
      %644 = vmatmul.mubr.bf16.gmra.mrb[0].mxu0 %v519
      %v645 = vpop.f32.mrb[0].mxu0
      %v646 = vadd.f32 %v397, %v645
      %v647 = vpop.f32.mrb[0].mxu0
      %v648 = vpop.f32.mrb[0].mxu0
      %v649 = vadd.f32 %v397, %v648
      %v650 = vpop.f32.mrb[0].mxu0
      %651 = vmatprep.mubr.bf16.mxu0 0
      %652 = vmatmul.mubr.bf16.gmra.mrb[0].mxu0 %v522
      %v653 = vpop.f32.mrb[0].mxu0
      %v654 = vadd.f32 %v397, %v653
      %v655 = vpop.f32.mrb[0].mxu0
      %v656 = vpop.f32.mrb[0].mxu0
      %v657 = vadd.f32 %v397, %v656
      %v658 = vpop.f32.mrb[0].mxu0
      %659 = vmatprep.mubr.bf16.mxu0 0
      %660 = vmatmul.mubr.bf16.gmra.mrb[0].mxu0 %v525
      %v661 = vpop.f32.mrb[0].mxu0
      %v662 = vadd.f32 %v397, %v661
      %v663 = vpop.f32.mrb[0].mxu0
      %v664 = vpop.f32.mrb[0].mxu0
      %v665 = vadd.f32 %v397, %v664
      %v666 = vpop.f32.mrb[0].mxu0
      %667 = vmatprep.mubr.bf16.mxu0 0
      %668 = vmatmul.mubr.bf16.gmra.mrb[0].mxu0 %v528
      %v669 = vpop.f32.mrb[0].mxu0
      %v670 = vadd.f32 %v397, %v669
      %v671 = vpop.f32.mrb[0].mxu0
      %v672 = vpop.f32.mrb[0].mxu0
      %v673 = vadd.f32 %v397, %v672
      %v674 = vpop.f32.mrb[0].mxu0
      %675 = vmatprep.mubr.bf16.mxu0 0
      %676 = vmatmul.mubr.bf16.gmra.mrb[0].mxu0 %v531
      %v677 = vpop.f32.mrb[0].mxu0
      %v678 = vadd.f32 %v397, %v677
      %v679 = vpop.f32.mrb[0].mxu0
      %v680 = vpop.f32.mrb[0].mxu0
      %v681 = vadd.f32 %v397, %v680
      %v682 = vpop.f32.mrb[0].mxu0
      %683 = vmatprep.mubr.bf16.mxu0 0
      %684 = vmatmul.mubr.bf16.gmra.mrb[0].mxu0 %v534
      %v685 = vpop.f32.mrb[0].mxu0
      %v686 = vadd.f32 %v397, %v685
      %v687 = vpop.f32.mrb[0].mxu0
      %v688 = vpop.f32.mrb[0].mxu0
      %v689 = vadd.f32 %v397, %v688
      %v690 = vpop.f32.mrb[0].mxu0
      %691 = vmatprep.mubr.bf16.mxu0 0
      %692 = vmatmul.mubr.bf16.gmra.mrb[0].mxu0 %v537
      %v693 = vpop.f32.mrb[0].mxu0
      %v694 = vadd.f32 %v397, %v693
      %v695 = vpop.f32.mrb[0].mxu0
      %v696 = vpop.f32.mrb[0].mxu0
      %v697 = vadd.f32 %v397, %v696
      %v698 = vpop.f32.mrb[0].mxu0
      %699 = vdwg.mxu0
      %v700 = vmax.f32 %v574, 0.0
      %v701 = vmax.f32 %v577, 0.0
      %v702 = vmax.f32 %v582, 0.0
      %v703 = vmax.f32 %v585, 0.0
      %v704 = vmax.f32 %v590, 0.0
      %v705 = vmax.f32 %v593, 0.0
      %v706 = vmax.f32 %v598, 0.0
      %v707 = vmax.f32 %v601, 0.0
      %v708 = vmax.f32 %v606, 0.0
      %v709 = vmax.f32 %v609, 0.0
      %v710 = vmax.f32 %v614, 0.0
      %v711 = vmax.f32 %v617, 0.0
      %v712 = vmax.f32 %v622, 0.0
      %v713 = vmax.f32 %v625, 0.0
      %v714 = vmax.f32 %v630, 0.0
      %v715 = vmax.f32 %v633, 0.0
      %v716 = vmax.f32 %v638, 0.0
      %v717 = vmax.f32 %v641, 0.0
      %v718 = vmax.f32 %v646, 0.0
      %v719 = vmax.f32 %v649, 0.0
      %v720 = vmax.f32 %v654, 0.0
      %v721 = vmax.f32 %v657, 0.0
      %v722 = vmax.f32 %v662, 0.0
      %v723 = vmax.f32 %v665, 0.0
      %v724 = vmax.f32 %v670, 0.0
      %v725 = vmax.f32 %v673, 0.0
      %v726 = vmax.f32 %v678, 0.0
      %v727 = vmax.f32 %v681, 0.0
      %v728 = vmax.f32 %v686, 0.0
      %v729 = vmax.f32 %v689, 0.0
      %v730 = vmax.f32 %v694, 0.0
      %v731 = vmax.f32 %v697, 0.0
      %v764 = vunpack.c.l.b16 %v356
      %v765 = vunpack.c.l.b16 %v357
      %v766 = vunpack.c.l.b16 %v358
      %v767 = vunpack.c.l.b16 %v359
      %v768 = vunpack.c.l.b16 %v360
      %v769 = vunpack.c.l.b16 %v361
      %v770 = vunpack.c.l.b16 %v362
      %v771 = vunpack.c.l.b16 %v363
      %v772 = vunpack.c.l.b16 %v364
      %v773 = vunpack.c.l.b16 %v365
      %v774 = vunpack.c.l.b16 %v366
      %v775 = vunpack.c.l.b16 %v367
      %v776 = vunpack.c.l.b16 %v368
      %v777 = vunpack.c.l.b16 %v369
      %v778 = vunpack.c.l.b16 %v370
      %v779 = vunpack.c.l.b16 %v371
      %v780 = vunpack.c.l.b16 %v372
      %v781 = vunpack.c.l.b16 %v373
      %v782 = vunpack.c.l.b16 %v374
      %v783 = vunpack.c.l.b16 %v375
      %v784 = vunpack.c.l.b16 %v376
      %v785 = vunpack.c.l.b16 %v377
      %v786 = vunpack.c.l.b16 %v378
      %v787 = vunpack.c.l.b16 %v379
      %v788 = vunpack.c.l.b16 %v380
      %v789 = vunpack.c.l.b16 %v381
      %v790 = vunpack.c.l.b16 %v382
      %v791 = vunpack.c.l.b16 %v383
      %v792 = vunpack.c.l.b16 %v384
      %v793 = vunpack.c.l.b16 %v385
      %v794 = vunpack.c.l.b16 %v386
      %v795 = vunpack.c.l.b16 %v387
      %v796 = vpack.c.b16 %v765, %v764
      %v797 = vpack.c.b16 %v767, %v766
      %v798 = vpack.c.b16 %v769, %v768
      %v799 = vpack.c.b16 %v771, %v770
      %v800 = vpack.c.b16 %v773, %v772
      %v801 = vpack.c.b16 %v775, %v774
      %v802 = vpack.c.b16 %v777, %v776
      %v803 = vpack.c.b16 %v779, %v778
      %v804 = vpack.c.b16 %v781, %v780
      %v805 = vpack.c.b16 %v783, %v782
      %v806 = vpack.c.b16 %v785, %v784
      %v807 = vpack.c.b16 %v787, %v786
      %v808 = vpack.c.b16 %v789, %v788
      %v809 = vpack.c.b16 %v791, %v790
      %v810 = vpack.c.b16 %v793, %v792
      %v811 = vpack.c.b16 %v795, %v794
      %v813 = vsel %vm490, %v796, 0
      %v816 = vsel %vm490, %v797, 0
      %v819 = vsel %vm490, %v798, 0
      %v822 = vsel %vm490, %v799, 0
      %v825 = vsel %vm490, %v800, 0
      %v828 = vsel %vm490, %v801, 0
      %v831 = vsel %vm490, %v802, 0
      %v834 = vsel %vm490, %v803, 0
      %v837 = vsel %vm490, %v804, 0
      %v840 = vsel %vm490, %v805, 0
      %v843 = vsel %vm490, %v806, 0
      %v846 = vsel %vm490, %v807, 0
      %v849 = vsel %vm490, %v808, 0
      %v852 = vsel %vm490, %v809, 0
      %v855 = vsel %vm490, %v810, 0
      %v858 = vsel %vm490, %v811, 0
      %860 = vmatprep.subr.bf16.mxu0 0
      %861 = vmatpush1.bf16.msra.mxu0 %v486
      %862 = vmatprep.subr.bf16.mxu0 0
      %863 = vmatpush1.bf16.msra.mxu0 %v487
      %864 = vmatprep.subr.bf16.mxu0 0
      %865 = vmatpush1.bf16.msra.mxu0 0
      %866 = vmatprep.subr.bf16.mxu0 0
      %867 = vmatpush1.bf16.msra.mxu0 0
      %868 = vmatprep.subr.bf16.mxu0 0
      %869 = vmatpush1.bf16.msra.mxu0 0
      %870 = vmatprep.subr.bf16.mxu0 0
      %871 = vmatpush1.bf16.msra.mxu0 0
      %872 = vmatprep.subr.bf16.mxu0 0
      %873 = vmatpush1.bf16.msra.mxu0 0
      %874 = vmatprep.subr.bf16.mxu0 0
      %875 = vmatpush1.bf16.msra.mxu0 0
      %876 = vmatprep.subr.bf16.mxu0 0
      %877 = vmatpush1.bf16.msra.mxu0 0
      %878 = vmatprep.subr.bf16.mxu0 0
      %879 = vmatpush1.bf16.msra.mxu0 0
      %880 = vmatprep.subr.bf16.mxu0 0
      %881 = vmatpush1.bf16.msra.mxu0 0
      %882 = vmatprep.subr.bf16.mxu0 0
      %883 = vmatpush1.bf16.msra.mxu0 0
      %884 = vmatprep.subr.bf16.mxu0 0
      %885 = vmatpush1.bf16.msra.mxu0 0
      %886 = vmatprep.subr.bf16.mxu0 0
      %887 = vmatpush1.bf16.msra.mxu0 0
      %888 = vmatprep.subr.bf16.mxu0 0
      %889 = vmatpush1.bf16.msra.mxu0 0
      %890 = vmatprep.subr.bf16.mxu0 0
      %891 = vmatpush1.bf16.msra.mxu0 0
      %892 = vmatprep.mubr.bf16.mxu0 0
      %893 = vmatmul.mubr.bf16.gmra.mrb[0].mxu0 %v813
      %v894 = vpop.f32.mrb[0].mxu0
      %v895 = vadd.f32 %v397, %v894
      %v896 = vpop.f32.mrb[0].mxu0
      %v897 = vpop.f32.mrb[0].mxu0
      %v898 = vadd.f32 %v397, %v897
      %v899 = vpop.f32.mrb[0].mxu0
      %900 = vmatprep.mubr.bf16.mxu0 0
      %901 = vmatmul.mubr.bf16.gmra.mrb[0].mxu0 %v816
      %v902 = vpop.f32.mrb[0].mxu0
      %v903 = vadd.f32 %v397, %v902
      %v904 = vpop.f32.mrb[0].mxu0
      %v905 = vpop.f32.mrb[0].mxu0
      %v906 = vadd.f32 %v397, %v905
      %v907 = vpop.f32.mrb[0].mxu0
      %908 = vmatprep.mubr.bf16.mxu0 0
      %909 = vmatmul.mubr.bf16.gmra.mrb[0].mxu0 %v819
      %v910 = vpop.f32.mrb[0].mxu0
      %v911 = vadd.f32 %v397, %v910
      %v912 = vpop.f32.mrb[0].mxu0
      %v913 = vpop.f32.mrb[0].mxu0
      %v914 = vadd.f32 %v397, %v913
      %v915 = vpop.f32.mrb[0].mxu0
      %916 = vmatprep.mubr.bf16.mxu0 0
      %917 = vmatmul.mubr.bf16.gmra.mrb[0].mxu0 %v822
      %v918 = vpop.f32.mrb[0].mxu0
      %v919 = vadd.f32 %v397, %v918
      %v920 = vpop.f32.mrb[0].mxu0
      %v921 = vpop.f32.mrb[0].mxu0
      %v922 = vadd.f32 %v397, %v921
      %v923 = vpop.f32.mrb[0].mxu0
      %924 = vmatprep.mubr.bf16.mxu0 0
      %925 = vmatmul.mubr.bf16.gmra.mrb[0].mxu0 %v825
      %v926 = vpop.f32.mrb[0].mxu0
      %v927 = vadd.f32 %v397, %v926
      %v928 = vpop.f32.mrb[0].mxu0
      %v929 = vpop.f32.mrb[0].mxu0
      %v930 = vadd.f32 %v397, %v929
      %v931 = vpop.f32.mrb[0].mxu0
      %932 = vmatprep.mubr.bf16.mxu0 0
      %933 = vmatmul.mubr.bf16.gmra.mrb[0].mxu0 %v828
      %v934 = vpop.f32.mrb[0].mxu0
      %v935 = vadd.f32 %v397, %v934
      %v936 = vpop.f32.mrb[0].mxu0
      %v937 = vpop.f32.mrb[0].mxu0
      %v938 = vadd.f32 %v397, %v937
      %v939 = vpop.f32.mrb[0].mxu0
      %940 = vmatprep.mubr.bf16.mxu0 0
      %941 = vmatmul.mubr.bf16.gmra.mrb[0].mxu0 %v831
      %v942 = vpop.f32.mrb[0].mxu0
      %v943 = vadd.f32 %v397, %v942
      %v944 = vpop.f32.mrb[0].mxu0
      %v945 = vpop.f32.mrb[0].mxu0
      %v946 = vadd.f32 %v397, %v945
      %v947 = vpop.f32.mrb[0].mxu0
      %948 = vmatprep.mubr.bf16.mxu0 0
      %949 = vmatmul.mubr.bf16.gmra.mrb[0].mxu0 %v834
      %v950 = vpop.f32.mrb[0].mxu0
      %v951 = vadd.f32 %v397, %v950
      %v952 = vpop.f32.mrb[0].mxu0
      %v953 = vpop.f32.mrb[0].mxu0
      %v954 = vadd.f32 %v397, %v953
      %v955 = vpop.f32.mrb[0].mxu0
      %956 = vmatprep.mubr.bf16.mxu0 0
      %957 = vmatmul.mubr.bf16.gmra.mrb[0].mxu0 %v837
      %v958 = vpop.f32.mrb[0].mxu0
      %v959 = vadd.f32 %v397, %v958
      %v960 = vpop.f32.mrb[0].mxu0
      %v961 = vpop.f32.mrb[0].mxu0
      %v962 = vadd.f32 %v397, %v961
      %v963 = vpop.f32.mrb[0].mxu0
      %964 = vmatprep.mubr.bf16.mxu0 0
      %965 = vmatmul.mubr.bf16.gmra.mrb[0].mxu0 %v840
      %v966 = vpop.f32.mrb[0].mxu0
      %v967 = vadd.f32 %v397, %v966
      %v968 = vpop.f32.mrb[0].mxu0
      %v969 = vpop.f32.mrb[0].mxu0
      %v970 = vadd.f32 %v397, %v969
      %v971 = vpop.f32.mrb[0].mxu0
      %972 = vmatprep.mubr.bf16.mxu0 0
      %973 = vmatmul.mubr.bf16.gmra.mrb[0].mxu0 %v843
      %v974 = vpop.f32.mrb[0].mxu0
      %v975 = vadd.f32 %v397, %v974
      %v976 = vpop.f32.mrb[0].mxu0
      %v977 = vpop.f32.mrb[0].mxu0
      %v978 = vadd.f32 %v397, %v977
      %v979 = vpop.f32.mrb[0].mxu0
      %980 = vmatprep.mubr.bf16.mxu0 0
      %981 = vmatmul.mubr.bf16.gmra.mrb[0].mxu0 %v846
      %v982 = vpop.f32.mrb[0].mxu0
      %v983 = vadd.f32 %v397, %v982
      %v984 = vpop.f32.mrb[0].mxu0
      %v985 = vpop.f32.mrb[0].mxu0
      %v986 = vadd.f32 %v397, %v985
      %v987 = vpop.f32.mrb[0].mxu0
      %988 = vmatprep.mubr.bf16.mxu0 0
      %989 = vmatmul.mubr.bf16.gmra.mrb[0].mxu0 %v849
      %v990 = vpop.f32.mrb[0].mxu0
      %v991 = vadd.f32 %v397, %v990
      %v992 = vpop.f32.mrb[0].mxu0
      %v993 = vpop.f32.mrb[0].mxu0
      %v994 = vadd.f32 %v397, %v993
      %v995 = vpop.f32.mrb[0].mxu0
      %996 = vmatprep.mubr.bf16.mxu0 0
      %997 = vmatmul.mubr.bf16.gmra.mrb[0].mxu0 %v852
      %v998 = vpop.f32.mrb[0].mxu0
      %v999 = vadd.f32 %v397, %v998
      %v1000 = vpop.f32.mrb[0].mxu0
      %v1001 = vpop.f32.mrb[0].mxu0
      %v1002 = vadd.f32 %v397, %v1001
      %v1003 = vpop.f32.mrb[0].mxu0
      %1004 = vmatprep.mubr.bf16.mxu0 0
      %1005 = vmatmul.mubr.bf16.gmra.mrb[0].mxu0 %v855
      %v1006 = vpop.f32.mrb[0].mxu0
      %v1007 = vadd.f32 %v397, %v1006
      %v1008 = vpop.f32.mrb[0].mxu0
      %v1009 = vpop.f32.mrb[0].mxu0
      %v1010 = vadd.f32 %v397, %v1009
      %v1011 = vpop.f32.mrb[0].mxu0
      %1012 = vmatprep.mubr.bf16.mxu0 0
      %1013 = vmatmul.mubr.bf16.gmra.mrb[0].mxu0 %v858
      %v1014 = vpop.f32.mrb[0].mxu0
      %v1015 = vadd.f32 %v397, %v1014
      %v1016 = vpop.f32.mrb[0].mxu0
      %v1017 = vpop.f32.mrb[0].mxu0
      %v1018 = vadd.f32 %v397, %v1017
      %v1019 = vpop.f32.mrb[0].mxu0
      %1020 = vdwg.mxu0
      %v1021 = vmax.f32 %v895, 0.0
      %v1022 = vmax.f32 %v898, 0.0
      %v1023 = vmax.f32 %v903, 0.0
      %v1024 = vmax.f32 %v906, 0.0
      %v1025 = vmax.f32 %v911, 0.0
      %v1026 = vmax.f32 %v914, 0.0
      %v1027 = vmax.f32 %v919, 0.0
      %v1028 = vmax.f32 %v922, 0.0
      %v1029 = vmax.f32 %v927, 0.0
      %v1030 = vmax.f32 %v930, 0.0
      %v1031 = vmax.f32 %v935, 0.0
      %v1032 = vmax.f32 %v938, 0.0
      %v1033 = vmax.f32 %v943, 0.0
      %v1034 = vmax.f32 %v946, 0.0
      %v1035 = vmax.f32 %v951, 0.0
      %v1036 = vmax.f32 %v954, 0.0
      %v1037 = vmax.f32 %v959, 0.0
      %v1038 = vmax.f32 %v962, 0.0
      %v1039 = vmax.f32 %v967, 0.0
      %v1040 = vmax.f32 %v970, 0.0
      %v1041 = vmax.f32 %v975, 0.0
      %v1042 = vmax.f32 %v978, 0.0
      %v1043 = vmax.f32 %v983, 0.0
      %v1044 = vmax.f32 %v986, 0.0
      %v1045 = vmax.f32 %v991, 0.0
      %v1046 = vmax.f32 %v994, 0.0
      %v1047 = vmax.f32 %v999, 0.0
      %v1048 = vmax.f32 %v1002, 0.0
      %v1049 = vmax.f32 %v1007, 0.0
      %v1050 = vmax.f32 %v1010, 0.0
      %v1051 = vmax.f32 %v1015, 0.0
      %v1052 = vmax.f32 %v1018, 0.0
      %v1053 = vlaneseq
      %v1054 = vand.u32 %v1053, 127
      %vm1055 = vcmp.lt.s32.totalorder %v1054, 8
      %v1056 = vsel %vm1055, 1, 0
      %v1057 = vcvt.s32.f32 %v1056
      %vm1058 = vcmp.ge.s32.totalorder %v1054, 8
      %v1059 = vsel %vm1058, 1, 0
      %v1060 = vcvt.s32.f32 %v1059
      %v1061 = vld [vmem:[%s308] sm:$0x1]
      %v1062 = vsub.f32 %v700, %v1021
      %v1063 = vsub.f32 %v701, %v1022
      %v1064 = vsub.f32 %v702, %v1023
      %v1065 = vsub.f32 %v703, %v1024
      %v1066 = vsub.f32 %v704, %v1025
      %v1067 = vsub.f32 %v705, %v1026
      %v1068 = vsub.f32 %v706, %v1027
      %v1069 = vsub.f32 %v707, %v1028
      %v1070 = vsub.f32 %v708, %v1029
      %v1071 = vsub.f32 %v709, %v1030
      %v1072 = vsub.f32 %v710, %v1031
      %v1073 = vsub.f32 %v711, %v1032
      %v1074 = vsub.f32 %v712, %v1033
      %v1075 = vsub.f32 %v713, %v1034
      %v1076 = vsub.f32 %v714, %v1035
      %v1077 = vsub.f32 %v715, %v1036
      %v1078 = vsub.f32 %v716, %v1037
      %v1079 = vsub.f32 %v717, %v1038
      %v1080 = vsub.f32 %v718, %v1039
      %v1081 = vsub.f32 %v719, %v1040
      %v1082 = vsub.f32 %v720, %v1041
      %v1083 = vsub.f32 %v721, %v1042
      %v1084 = vsub.f32 %v722, %v1043
      %v1085 = vsub.f32 %v723, %v1044
      %v1086 = vsub.f32 %v724, %v1045
      %v1087 = vsub.f32 %v725, %v1046
      %v1088 = vsub.f32 %v726, %v1047
      %v1089 = vsub.f32 %v727, %v1048
      %v1090 = vsub.f32 %v728, %v1049
      %v1091 = vsub.f32 %v729, %v1050
      %v1092 = vsub.f32 %v730, %v1051
      %v1093 = vsub.f32 %v731, %v1052
      %v1094 = vand.u32 2147483647, %v1062
      %v1095 = vand.u32 2147483647, %v1063
      %v1096 = vand.u32 2147483647, %v1064
      %v1097 = vand.u32 2147483647, %v1065
      %v1098 = vand.u32 2147483647, %v1066
      %v1099 = vand.u32 2147483647, %v1067
      %v1100 = vand.u32 2147483647, %v1068
      %v1101 = vand.u32 2147483647, %v1069
      %v1102 = vand.u32 2147483647, %v1070
      %v1103 = vand.u32 2147483647, %v1071
      %v1104 = vand.u32 2147483647, %v1072
      %v1105 = vand.u32 2147483647, %v1073
      %v1106 = vand.u32 2147483647, %v1074
      %v1107 = vand.u32 2147483647, %v1075
      %v1108 = vand.u32 2147483647, %v1076
      %v1109 = vand.u32 2147483647, %v1077
      %v1110 = vand.u32 2147483647, %v1078
      %v1111 = vand.u32 2147483647, %v1079
      %v1112 = vand.u32 2147483647, %v1080
      %v1113 = vand.u32 2147483647, %v1081
      %v1114 = vand.u32 2147483647, %v1082
      %v1115 = vand.u32 2147483647, %v1083
      %v1116 = vand.u32 2147483647, %v1084
      %v1117 = vand.u32 2147483647, %v1085
      %v1118 = vand.u32 2147483647, %v1086
      %v1119 = vand.u32 2147483647, %v1087
      %v1120 = vand.u32 2147483647, %v1088
      %v1121 = vand.u32 2147483647, %v1089
      %v1122 = vand.u32 2147483647, %v1090
      %v1123 = vand.u32 2147483647, %v1091
      %v1124 = vand.u32 2147483647, %v1092
      %v1125 = vand.u32 2147483647, %v1093
      %v1126 = vmul.f32 %v1094, %v1057
      %v1127 = vmul.f32 %v1095, %v1057
      %v1128 = vmul.f32 %v1096, %v1057
      %v1129 = vmul.f32 %v1097, %v1057
      %v1130 = vmul.f32 %v1098, %v1057
      %v1131 = vmul.f32 %v1099, %v1057
      %v1132 = vmul.f32 %v1100, %v1057
      %v1133 = vmul.f32 %v1101, %v1057
      %v1134 = vmul.f32 %v1102, %v1057
      %v1135 = vmul.f32 %v1103, %v1057
      %v1136 = vmul.f32 %v1104, %v1057
      %v1137 = vmul.f32 %v1105, %v1057
      %v1138 = vmul.f32 %v1106, %v1057
      %v1139 = vmul.f32 %v1107, %v1057
      %v1140 = vmul.f32 %v1108, %v1057
      %v1141 = vmul.f32 %v1109, %v1057
      %v1142 = vmul.f32 %v1110, %v1057
      %v1143 = vmul.f32 %v1111, %v1057
      %v1144 = vmul.f32 %v1112, %v1057
      %v1145 = vmul.f32 %v1113, %v1057
      %v1146 = vmul.f32 %v1114, %v1057
      %v1147 = vmul.f32 %v1115, %v1057
      %v1148 = vmul.f32 %v1116, %v1057
      %v1149 = vmul.f32 %v1117, %v1057
      %v1150 = vmul.f32 %v1118, %v1057
      %v1151 = vmul.f32 %v1119, %v1057
      %v1152 = vmul.f32 %v1120, %v1057
      %v1153 = vmul.f32 %v1121, %v1057
      %v1154 = vmul.f32 %v1122, %v1057
      %v1155 = vmul.f32 %v1123, %v1057
      %v1156 = vmul.f32 %v1124, %v1057
      %v1157 = vmul.f32 %v1125, %v1057
      %v1158 = vadd.f32 %v1126, %v1127
      %v1159 = vadd.f32 %v1158, %v1128
      %v1160 = vadd.f32 %v1159, %v1129
      %v1161 = vadd.f32 %v1160, %v1130
      %v1162 = vadd.f32 %v1161, %v1131
      %v1163 = vadd.f32 %v1162, %v1132
      %v1164 = vadd.f32 %v1163, %v1133
      %v1165 = vadd.f32 %v1164, %v1134
      %v1166 = vadd.f32 %v1165, %v1135
      %v1167 = vadd.f32 %v1166, %v1136
      %v1168 = vadd.f32 %v1167, %v1137
      %v1169 = vadd.f32 %v1168, %v1138
      %v1170 = vadd.f32 %v1169, %v1139
      %v1171 = vadd.f32 %v1170, %v1140
      %v1172 = vadd.f32 %v1171, %v1141
      %v1173 = vadd.f32 %v1172, %v1142
      %v1174 = vadd.f32 %v1173, %v1143
      %v1175 = vadd.f32 %v1174, %v1144
      %v1176 = vadd.f32 %v1175, %v1145
      %v1177 = vadd.f32 %v1176, %v1146
      %v1178 = vadd.f32 %v1177, %v1147
      %v1179 = vadd.f32 %v1178, %v1148
      %v1180 = vadd.f32 %v1179, %v1149
      %v1181 = vadd.f32 %v1180, %v1150
      %v1182 = vadd.f32 %v1181, %v1151
      %v1183 = vadd.f32 %v1182, %v1152
      %v1184 = vadd.f32 %v1183, %v1153
      %v1185 = vadd.f32 %v1184, %v1154
      %v1186 = vadd.f32 %v1185, %v1155
      %v1187 = vadd.f32 %v1186, %v1156
      %v1188 = vadd.f32 %v1187, %v1157
      %v1189 = vrot.slane %v1188, 4
      %v1190 = vadd.f32 %v1188, %v1189
      %v1191 = vrot.slane %v1190, 2
      %v1192 = vadd.f32 %v1190, %v1191
      %v1193 = vrot.slane %v1192, 1
      %v1194 = vadd.f32 %v1192, %v1193
      %v1195 = vadd.f32 %v1061, %v1194
      %1196 = vst [vmem:[%s308] sm:$0x1] %v1195
      %v1197 = vmul.f32 %v700, %v1060
      %v1198 = vmul.f32 %v701, %v1060
      %v1199 = vmul.f32 %v702, %v1060
      %v1200 = vmul.f32 %v703, %v1060
      %v1201 = vmul.f32 %v704, %v1060
      %v1202 = vmul.f32 %v705, %v1060
      %v1203 = vmul.f32 %v706, %v1060
      %v1204 = vmul.f32 %v707, %v1060
      %v1205 = vmul.f32 %v708, %v1060
      %v1206 = vmul.f32 %v709, %v1060
      %v1207 = vmul.f32 %v710, %v1060
      %v1208 = vmul.f32 %v711, %v1060
      %v1209 = vmul.f32 %v712, %v1060
      %v1210 = vmul.f32 %v713, %v1060
      %v1211 = vmul.f32 %v714, %v1060
      %v1212 = vmul.f32 %v715, %v1060
      %v1213 = vmul.f32 %v716, %v1060
      %v1214 = vmul.f32 %v717, %v1060
      %v1215 = vmul.f32 %v718, %v1060
      %v1216 = vmul.f32 %v719, %v1060
      %v1217 = vmul.f32 %v720, %v1060
      %v1218 = vmul.f32 %v721, %v1060
      %v1219 = vmul.f32 %v722, %v1060
      %v1220 = vmul.f32 %v723, %v1060
      %v1221 = vmul.f32 %v724, %v1060
      %v1222 = vmul.f32 %v725, %v1060
      %v1223 = vmul.f32 %v726, %v1060
      %v1224 = vmul.f32 %v727, %v1060
      %v1225 = vmul.f32 %v728, %v1060
      %v1226 = vmul.f32 %v729, %v1060
      %v1227 = vmul.f32 %v730, %v1060
      %v1228 = vmul.f32 %v731, %v1060
      %v1229 = vmul.f32 %v1021, %v1060
      %v1230 = vmul.f32 %v1022, %v1060
      %v1231 = vmul.f32 %v1023, %v1060
      %v1232 = vmul.f32 %v1024, %v1060
      %v1233 = vmul.f32 %v1025, %v1060
      %v1234 = vmul.f32 %v1026, %v1060
      %v1235 = vmul.f32 %v1027, %v1060
      %v1236 = vmul.f32 %v1028, %v1060
      %v1237 = vmul.f32 %v1029, %v1060
      %v1238 = vmul.f32 %v1030, %v1060
      %v1239 = vmul.f32 %v1031, %v1060
      %v1240 = vmul.f32 %v1032, %v1060
      %v1241 = vmul.f32 %v1033, %v1060
      %v1242 = vmul.f32 %v1034, %v1060
      %v1243 = vmul.f32 %v1035, %v1060
      %v1244 = vmul.f32 %v1036, %v1060
      %v1245 = vmul.f32 %v1037, %v1060
      %v1246 = vmul.f32 %v1038, %v1060
      %v1247 = vmul.f32 %v1039, %v1060
      %v1248 = vmul.f32 %v1040, %v1060
      %v1249 = vmul.f32 %v1041, %v1060
      %v1250 = vmul.f32 %v1042, %v1060
      %v1251 = vmul.f32 %v1043, %v1060
      %v1252 = vmul.f32 %v1044, %v1060
      %v1253 = vmul.f32 %v1045, %v1060
      %v1254 = vmul.f32 %v1046, %v1060
      %v1255 = vmul.f32 %v1047, %v1060
      %v1256 = vmul.f32 %v1048, %v1060
      %v1257 = vmul.f32 %v1049, %v1060
      %v1258 = vmul.f32 %v1050, %v1060
      %v1259 = vmul.f32 %v1051, %v1060
      %v1260 = vmul.f32 %v1052, %v1060
      %v1261 = vmul.f32 %v1197, %v1197
      %v1262 = vmul.f32 %v1198, %v1198
      %v1263 = vmul.f32 %v1199, %v1199
      %v1264 = vmul.f32 %v1200, %v1200
      %v1265 = vmul.f32 %v1201, %v1201
      %v1266 = vmul.f32 %v1202, %v1202
      %v1267 = vmul.f32 %v1203, %v1203
      %v1268 = vmul.f32 %v1204, %v1204
      %v1269 = vmul.f32 %v1205, %v1205
      %v1270 = vmul.f32 %v1206, %v1206
      %v1271 = vmul.f32 %v1207, %v1207
      %v1272 = vmul.f32 %v1208, %v1208
      %v1273 = vmul.f32 %v1209, %v1209
      %v1274 = vmul.f32 %v1210, %v1210
      %v1275 = vmul.f32 %v1211, %v1211
      %v1276 = vmul.f32 %v1212, %v1212
      %v1277 = vmul.f32 %v1213, %v1213
      %v1278 = vmul.f32 %v1214, %v1214
      %v1279 = vmul.f32 %v1215, %v1215
      %v1280 = vmul.f32 %v1216, %v1216
      %v1281 = vmul.f32 %v1217, %v1217
      %v1282 = vmul.f32 %v1218, %v1218
      %v1283 = vmul.f32 %v1219, %v1219
      %v1284 = vmul.f32 %v1220, %v1220
      %v1285 = vmul.f32 %v1221, %v1221
      %v1286 = vmul.f32 %v1222, %v1222
      %v1287 = vmul.f32 %v1223, %v1223
      %v1288 = vmul.f32 %v1224, %v1224
      %v1289 = vmul.f32 %v1225, %v1225
      %v1290 = vmul.f32 %v1226, %v1226
      %v1291 = vmul.f32 %v1227, %v1227
      %v1292 = vmul.f32 %v1228, %v1228
      %1293 = vadd.xlane.f32.xlu0 %v1261
      %v1294 = vpop.xlane.xlu0 %1293
      %1295 = vadd.xlane.f32.xlu0 %v1262
      %v1296 = vpop.xlane.xlu0 %1295
      %1297 = vadd.xlane.f32.xlu0 %v1263
      %v1298 = vpop.xlane.xlu0 %1297
      %1299 = vadd.xlane.f32.xlu0 %v1264
      %v1300 = vpop.xlane.xlu0 %1299
      %1301 = vadd.xlane.f32.xlu0 %v1265
      %v1302 = vpop.xlane.xlu0 %1301
      %1303 = vadd.xlane.f32.xlu0 %v1266
      %v1304 = vpop.xlane.xlu0 %1303
      %1305 = vadd.xlane.f32.xlu0 %v1267
      %v1306 = vpop.xlane.xlu0 %1305
      %1307 = vadd.xlane.f32.xlu0 %v1268
      %v1308 = vpop.xlane.xlu0 %1307
      %1309 = vadd.xlane.f32.xlu0 %v1269
      %v1310 = vpop.xlane.xlu0 %1309
      %1311 = vadd.xlane.f32.xlu0 %v1270
      %v1312 = vpop.xlane.xlu0 %1311
      %1313 = vadd.xlane.f32.xlu0 %v1271
      %v1314 = vpop.xlane.xlu0 %1313
      %1315 = vadd.xlane.f32.xlu0 %v1272
      %v1316 = vpop.xlane.xlu0 %1315
      %1317 = vadd.xlane.f32.xlu0 %v1273
      %v1318 = vpop.xlane.xlu0 %1317
      %1319 = vadd.xlane.f32.xlu0 %v1274
      %v1320 = vpop.xlane.xlu0 %1319
      %1321 = vadd.xlane.f32.xlu0 %v1275
      %v1322 = vpop.xlane.xlu0 %1321
      %1323 = vadd.xlane.f32.xlu0 %v1276
      %v1324 = vpop.xlane.xlu0 %1323
      %1325 = vadd.xlane.f32.xlu0 %v1277
      %v1326 = vpop.xlane.xlu0 %1325
      %1327 = vadd.xlane.f32.xlu0 %v1278
      %v1328 = vpop.xlane.xlu0 %1327
      %1329 = vadd.xlane.f32.xlu0 %v1279
      %v1330 = vpop.xlane.xlu0 %1329
      %1331 = vadd.xlane.f32.xlu0 %v1280
      %v1332 = vpop.xlane.xlu0 %1331
      %1333 = vadd.xlane.f32.xlu0 %v1281
      %v1334 = vpop.xlane.xlu0 %1333
      %1335 = vadd.xlane.f32.xlu0 %v1282
      %v1336 = vpop.xlane.xlu0 %1335
      %1337 = vadd.xlane.f32.xlu0 %v1283
      %v1338 = vpop.xlane.xlu0 %1337
      %1339 = vadd.xlane.f32.xlu0 %v1284
      %v1340 = vpop.xlane.xlu0 %1339
      %1341 = vadd.xlane.f32.xlu0 %v1285
      %v1342 = vpop.xlane.xlu0 %1341
      %1343 = vadd.xlane.f32.xlu0 %v1286
      %v1344 = vpop.xlane.xlu0 %1343
      %1345 = vadd.xlane.f32.xlu0 %v1287
      %v1346 = vpop.xlane.xlu0 %1345
      %1347 = vadd.xlane.f32.xlu0 %v1288
      %v1348 = vpop.xlane.xlu0 %1347
      %1349 = vadd.xlane.f32.xlu0 %v1289
      %v1350 = vpop.xlane.xlu0 %1349
      %1351 = vadd.xlane.f32.xlu0 %v1290
      %v1352 = vpop.xlane.xlu0 %1351
      %1353 = vadd.xlane.f32.xlu0 %v1291
      %v1354 = vpop.xlane.xlu0 %1353
      %1355 = vadd.xlane.f32.xlu0 %v1292
      %v1356 = vpop.xlane.xlu0 %1355
      %v1357 = vadd.f32 %v1294, 1e-10
      %v1358 = vadd.f32 %v1296, 1e-10
      %v1359 = vadd.f32 %v1298, 1e-10
      %v1360 = vadd.f32 %v1300, 1e-10
      %v1361 = vadd.f32 %v1302, 1e-10
      %v1362 = vadd.f32 %v1304, 1e-10
      %v1363 = vadd.f32 %v1306, 1e-10
      %v1364 = vadd.f32 %v1308, 1e-10
      %v1365 = vadd.f32 %v1310, 1e-10
      %v1366 = vadd.f32 %v1312, 1e-10
      %v1367 = vadd.f32 %v1314, 1e-10
      %v1368 = vadd.f32 %v1316, 1e-10
      %v1369 = vadd.f32 %v1318, 1e-10
      %v1370 = vadd.f32 %v1320, 1e-10
      %v1371 = vadd.f32 %v1322, 1e-10
      %v1372 = vadd.f32 %v1324, 1e-10
      %v1373 = vadd.f32 %v1326, 1e-10
      %v1374 = vadd.f32 %v1328, 1e-10
      %v1375 = vadd.f32 %v1330, 1e-10
      %v1376 = vadd.f32 %v1332, 1e-10
      %v1377 = vadd.f32 %v1334, 1e-10
      %v1378 = vadd.f32 %v1336, 1e-10
      %v1379 = vadd.f32 %v1338, 1e-10
      %v1380 = vadd.f32 %v1340, 1e-10
      %v1381 = vadd.f32 %v1342, 1e-10
      %v1382 = vadd.f32 %v1344, 1e-10
      %v1383 = vadd.f32 %v1346, 1e-10
      %v1384 = vadd.f32 %v1348, 1e-10
      %v1385 = vadd.f32 %v1350, 1e-10
      %v1386 = vadd.f32 %v1352, 1e-10
      %v1387 = vadd.f32 %v1354, 1e-10
      %v1388 = vadd.f32 %v1356, 1e-10
      %v1389 = vrsqrt.pop %v1357
      %v1390 = vrsqrt.pop %v1358
      %v1391 = vrsqrt.pop %v1359
      %v1392 = vrsqrt.pop %v1360
      %v1393 = vrsqrt.pop %v1361
      %v1394 = vrsqrt.pop %v1362
      %v1395 = vrsqrt.pop %v1363
      %v1396 = vrsqrt.pop %v1364
      %v1397 = vrsqrt.pop %v1365
      %v1398 = vrsqrt.pop %v1366
      %v1399 = vrsqrt.pop %v1367
      %v1400 = vrsqrt.pop %v1368
      %v1401 = vrsqrt.pop %v1369
      %v1402 = vrsqrt.pop %v1370
      %v1403 = vrsqrt.pop %v1371
      %v1404 = vrsqrt.pop %v1372
      %v1405 = vrsqrt.pop %v1373
      %v1406 = vrsqrt.pop %v1374
      %v1407 = vrsqrt.pop %v1375
      %v1408 = vrsqrt.pop %v1376
      %v1409 = vrsqrt.pop %v1377
      %v1410 = vrsqrt.pop %v1378
      %v1411 = vrsqrt.pop %v1379
      %v1412 = vrsqrt.pop %v1380
      %v1413 = vrsqrt.pop %v1381
      %v1414 = vrsqrt.pop %v1382
      %v1415 = vrsqrt.pop %v1383
      %v1416 = vrsqrt.pop %v1384
      %v1417 = vrsqrt.pop %v1385
      %v1418 = vrsqrt.pop %v1386
      %v1419 = vrsqrt.pop %v1387
      %v1420 = vrsqrt.pop %v1388
      %v1421 = vmul.f32 %v1197, %v1389
      %v1422 = vmul.f32 %v1198, %v1390
      %v1423 = vmul.f32 %v1199, %v1391
      %v1424 = vmul.f32 %v1200, %v1392
      %v1425 = vmul.f32 %v1201, %v1393
      %v1426 = vmul.f32 %v1202, %v1394
      %v1427 = vmul.f32 %v1203, %v1395
      %v1428 = vmul.f32 %v1204, %v1396
      %v1429 = vmul.f32 %v1205, %v1397
      %v1430 = vmul.f32 %v1206, %v1398
      %v1431 = vmul.f32 %v1207, %v1399
      %v1432 = vmul.f32 %v1208, %v1400
      %v1433 = vmul.f32 %v1209, %v1401
      %v1434 = vmul.f32 %v1210, %v1402
      %v1435 = vmul.f32 %v1211, %v1403
      %v1436 = vmul.f32 %v1212, %v1404
      %v1437 = vmul.f32 %v1213, %v1405
      %v1438 = vmul.f32 %v1214, %v1406
      %v1439 = vmul.f32 %v1215, %v1407
      %v1440 = vmul.f32 %v1216, %v1408
      %v1441 = vmul.f32 %v1217, %v1409
      %v1442 = vmul.f32 %v1218, %v1410
      %v1443 = vmul.f32 %v1219, %v1411
      %v1444 = vmul.f32 %v1220, %v1412
      %v1445 = vmul.f32 %v1221, %v1413
      %v1446 = vmul.f32 %v1222, %v1414
      %v1447 = vmul.f32 %v1223, %v1415
      %v1448 = vmul.f32 %v1224, %v1416
      %v1449 = vmul.f32 %v1225, %v1417
      %v1450 = vmul.f32 %v1226, %v1418
      %v1451 = vmul.f32 %v1227, %v1419
      %v1452 = vmul.f32 %v1228, %v1420
      %v1453 = vmul.f32 %v1229, %v1229
      %v1454 = vmul.f32 %v1230, %v1230
      %v1455 = vmul.f32 %v1231, %v1231
      %v1456 = vmul.f32 %v1232, %v1232
      %v1457 = vmul.f32 %v1233, %v1233
      %v1458 = vmul.f32 %v1234, %v1234
      %v1459 = vmul.f32 %v1235, %v1235
      %v1460 = vmul.f32 %v1236, %v1236
      %v1461 = vmul.f32 %v1237, %v1237
      %v1462 = vmul.f32 %v1238, %v1238
      %v1463 = vmul.f32 %v1239, %v1239
      %v1464 = vmul.f32 %v1240, %v1240
      %v1465 = vmul.f32 %v1241, %v1241
      %v1466 = vmul.f32 %v1242, %v1242
      %v1467 = vmul.f32 %v1243, %v1243
      %v1468 = vmul.f32 %v1244, %v1244
      %v1469 = vmul.f32 %v1245, %v1245
      %v1470 = vmul.f32 %v1246, %v1246
      %v1471 = vmul.f32 %v1247, %v1247
      %v1472 = vmul.f32 %v1248, %v1248
      %v1473 = vmul.f32 %v1249, %v1249
      %v1474 = vmul.f32 %v1250, %v1250
      %v1475 = vmul.f32 %v1251, %v1251
      %v1476 = vmul.f32 %v1252, %v1252
      %v1477 = vmul.f32 %v1253, %v1253
      %v1478 = vmul.f32 %v1254, %v1254
      %v1479 = vmul.f32 %v1255, %v1255
      %v1480 = vmul.f32 %v1256, %v1256
      %v1481 = vmul.f32 %v1257, %v1257
      %v1482 = vmul.f32 %v1258, %v1258
      %v1483 = vmul.f32 %v1259, %v1259
      %v1484 = vmul.f32 %v1260, %v1260
      %1485 = vadd.xlane.f32.xlu0 %v1453
      %v1486 = vpop.xlane.xlu0 %1485
      %1487 = vadd.xlane.f32.xlu0 %v1454
      %v1488 = vpop.xlane.xlu0 %1487
      %1489 = vadd.xlane.f32.xlu0 %v1455
      %v1490 = vpop.xlane.xlu0 %1489
      %1491 = vadd.xlane.f32.xlu0 %v1456
      %v1492 = vpop.xlane.xlu0 %1491
      %1493 = vadd.xlane.f32.xlu0 %v1457
      %v1494 = vpop.xlane.xlu0 %1493
      %1495 = vadd.xlane.f32.xlu0 %v1458
      %v1496 = vpop.xlane.xlu0 %1495
      %1497 = vadd.xlane.f32.xlu0 %v1459
      %v1498 = vpop.xlane.xlu0 %1497
      %1499 = vadd.xlane.f32.xlu0 %v1460
      %v1500 = vpop.xlane.xlu0 %1499
      %1501 = vadd.xlane.f32.xlu0 %v1461
      %v1502 = vpop.xlane.xlu0 %1501
      %1503 = vadd.xlane.f32.xlu0 %v1462
      %v1504 = vpop.xlane.xlu0 %1503
      %1505 = vadd.xlane.f32.xlu0 %v1463
      %v1506 = vpop.xlane.xlu0 %1505
      %1507 = vadd.xlane.f32.xlu0 %v1464
      %v1508 = vpop.xlane.xlu0 %1507
      %1509 = vadd.xlane.f32.xlu0 %v1465
      %v1510 = vpop.xlane.xlu0 %1509
      %1511 = vadd.xlane.f32.xlu0 %v1466
      %v1512 = vpop.xlane.xlu0 %1511
      %1513 = vadd.xlane.f32.xlu0 %v1467
      %v1514 = vpop.xlane.xlu0 %1513
      %1515 = vadd.xlane.f32.xlu0 %v1468
      %v1516 = vpop.xlane.xlu0 %1515
      %1517 = vadd.xlane.f32.xlu0 %v1469
      %v1518 = vpop.xlane.xlu0 %1517
      %1519 = vadd.xlane.f32.xlu0 %v1470
      %v1520 = vpop.xlane.xlu0 %1519
      %1521 = vadd.xlane.f32.xlu0 %v1471
      %v1522 = vpop.xlane.xlu0 %1521
      %1523 = vadd.xlane.f32.xlu0 %v1472
      %v1524 = vpop.xlane.xlu0 %1523
      %1525 = vadd.xlane.f32.xlu0 %v1473
      %v1526 = vpop.xlane.xlu0 %1525
      %1527 = vadd.xlane.f32.xlu0 %v1474
      %v1528 = vpop.xlane.xlu0 %1527
      %1529 = vadd.xlane.f32.xlu0 %v1475
      %v1530 = vpop.xlane.xlu0 %1529
      %1531 = vadd.xlane.f32.xlu0 %v1476
      %v1532 = vpop.xlane.xlu0 %1531
      %1533 = vadd.xlane.f32.xlu0 %v1477
      %v1534 = vpop.xlane.xlu0 %1533
      %1535 = vadd.xlane.f32.xlu0 %v1478
      %v1536 = vpop.xlane.xlu0 %1535
      %1537 = vadd.xlane.f32.xlu0 %v1479
      %v1538 = vpop.xlane.xlu0 %1537
      %1539 = vadd.xlane.f32.xlu0 %v1480
      %v1540 = vpop.xlane.xlu0 %1539
      %1541 = vadd.xlane.f32.xlu0 %v1481
      %v1542 = vpop.xlane.xlu0 %1541
      %1543 = vadd.xlane.f32.xlu0 %v1482
      %v1544 = vpop.xlane.xlu0 %1543
      %1545 = vadd.xlane.f32.xlu0 %v1483
      %v1546 = vpop.xlane.xlu0 %1545
      %1547 = vadd.xlane.f32.xlu0 %v1484
      %v1548 = vpop.xlane.xlu0 %1547
      %v1549 = vadd.f32 %v1486, 1e-10
      %v1550 = vadd.f32 %v1488, 1e-10
      %v1551 = vadd.f32 %v1490, 1e-10
      %v1552 = vadd.f32 %v1492, 1e-10
      %v1553 = vadd.f32 %v1494, 1e-10
      %v1554 = vadd.f32 %v1496, 1e-10
      %v1555 = vadd.f32 %v1498, 1e-10
      %v1556 = vadd.f32 %v1500, 1e-10
      %v1557 = vadd.f32 %v1502, 1e-10
      %v1558 = vadd.f32 %v1504, 1e-10
      %v1559 = vadd.f32 %v1506, 1e-10
      %v1560 = vadd.f32 %v1508, 1e-10
      %v1561 = vadd.f32 %v1510, 1e-10
      %v1562 = vadd.f32 %v1512, 1e-10
      %v1563 = vadd.f32 %v1514, 1e-10
      %v1564 = vadd.f32 %v1516, 1e-10
      %v1565 = vadd.f32 %v1518, 1e-10
      %v1566 = vadd.f32 %v1520, 1e-10
      %v1567 = vadd.f32 %v1522, 1e-10
      %v1568 = vadd.f32 %v1524, 1e-10
      %v1569 = vadd.f32 %v1526, 1e-10
      %v1570 = vadd.f32 %v1528, 1e-10
      %v1571 = vadd.f32 %v1530, 1e-10
      %v1572 = vadd.f32 %v1532, 1e-10
      %v1573 = vadd.f32 %v1534, 1e-10
      %v1574 = vadd.f32 %v1536, 1e-10
      %v1575 = vadd.f32 %v1538, 1e-10
      %v1576 = vadd.f32 %v1540, 1e-10
      %v1577 = vadd.f32 %v1542, 1e-10
      %v1578 = vadd.f32 %v1544, 1e-10
      %v1579 = vadd.f32 %v1546, 1e-10
      %v1580 = vadd.f32 %v1548, 1e-10
      %v1581 = vrsqrt.pop %v1549
      %v1582 = vrsqrt.pop %v1550
      %v1583 = vrsqrt.pop %v1551
      %v1584 = vrsqrt.pop %v1552
      %v1585 = vrsqrt.pop %v1553
      %v1586 = vrsqrt.pop %v1554
      %v1587 = vrsqrt.pop %v1555
      %v1588 = vrsqrt.pop %v1556
      %v1589 = vrsqrt.pop %v1557
      %v1590 = vrsqrt.pop %v1558
      %v1591 = vrsqrt.pop %v1559
      %v1592 = vrsqrt.pop %v1560
      %v1593 = vrsqrt.pop %v1561
      %v1594 = vrsqrt.pop %v1562
      %v1595 = vrsqrt.pop %v1563
      %v1596 = vrsqrt.pop %v1564
      %v1597 = vrsqrt.pop %v1565
      %v1598 = vrsqrt.pop %v1566
      %v1599 = vrsqrt.pop %v1567
      %v1600 = vrsqrt.pop %v1568
      %v1601 = vrsqrt.pop %v1569
      %v1602 = vrsqrt.pop %v1570
      %v1603 = vrsqrt.pop %v1571
      %v1604 = vrsqrt.pop %v1572
      %v1605 = vrsqrt.pop %v1573
      %v1606 = vrsqrt.pop %v1574
      %v1607 = vrsqrt.pop %v1575
      %v1608 = vrsqrt.pop %v1576
      %v1609 = vrsqrt.pop %v1577
      %v1610 = vrsqrt.pop %v1578
      %v1611 = vrsqrt.pop %v1579
      %v1612 = vrsqrt.pop %v1580
      %v1613 = vmul.f32 %v1229, %v1581
      %v1614 = vmul.f32 %v1230, %v1582
      %v1615 = vmul.f32 %v1231, %v1583
      %v1616 = vmul.f32 %v1232, %v1584
      %v1617 = vmul.f32 %v1233, %v1585
      %v1618 = vmul.f32 %v1234, %v1586
      %v1619 = vmul.f32 %v1235, %v1587
      %v1620 = vmul.f32 %v1236, %v1588
      %v1621 = vmul.f32 %v1237, %v1589
      %v1622 = vmul.f32 %v1238, %v1590
      %v1623 = vmul.f32 %v1239, %v1591
      %v1624 = vmul.f32 %v1240, %v1592
      %v1625 = vmul.f32 %v1241, %v1593
      %v1626 = vmul.f32 %v1242, %v1594
      %v1627 = vmul.f32 %v1243, %v1595
      %v1628 = vmul.f32 %v1244, %v1596
      %v1629 = vmul.f32 %v1245, %v1597
      %v1630 = vmul.f32 %v1246, %v1598
      %v1631 = vmul.f32 %v1247, %v1599
      %v1632 = vmul.f32 %v1248, %v1600
      %v1633 = vmul.f32 %v1249, %v1601
      %v1634 = vmul.f32 %v1250, %v1602
      %v1635 = vmul.f32 %v1251, %v1603
      %v1636 = vmul.f32 %v1252, %v1604
      %v1637 = vmul.f32 %v1253, %v1605
      %v1638 = vmul.f32 %v1254, %v1606
      %v1639 = vmul.f32 %v1255, %v1607
      %v1640 = vmul.f32 %v1256, %v1608
      %v1641 = vmul.f32 %v1257, %v1609
      %v1642 = vmul.f32 %v1258, %v1610
      %v1643 = vmul.f32 %v1259, %v1611
      %v1644 = vmul.f32 %v1260, %v1612
      %v1645 = vld [vmem:[%s311] sm:$0x1]
      %v1646 = vsub.f32 %v1421, %v1613
      %v1647 = vsub.f32 %v1422, %v1614
      %v1648 = vsub.f32 %v1423, %v1615
      %v1649 = vsub.f32 %v1424, %v1616
      %v1650 = vsub.f32 %v1425, %v1617
      %v1651 = vsub.f32 %v1426, %v1618
      %v1652 = vsub.f32 %v1427, %v1619
      %v1653 = vsub.f32 %v1428, %v1620
      %v1654 = vsub.f32 %v1429, %v1621
      %v1655 = vsub.f32 %v1430, %v1622
      %v1656 = vsub.f32 %v1431, %v1623
      %v1657 = vsub.f32 %v1432, %v1624
      %v1658 = vsub.f32 %v1433, %v1625
      %v1659 = vsub.f32 %v1434, %v1626
      %v1660 = vsub.f32 %v1435, %v1627
      %v1661 = vsub.f32 %v1436, %v1628
      %v1662 = vsub.f32 %v1437, %v1629
      %v1663 = vsub.f32 %v1438, %v1630
      %v1664 = vsub.f32 %v1439, %v1631
      %v1665 = vsub.f32 %v1440, %v1632
      %v1666 = vsub.f32 %v1441, %v1633
      %v1667 = vsub.f32 %v1442, %v1634
      %v1668 = vsub.f32 %v1443, %v1635
      %v1669 = vsub.f32 %v1444, %v1636
      %v1670 = vsub.f32 %v1445, %v1637
      %v1671 = vsub.f32 %v1446, %v1638
      %v1672 = vsub.f32 %v1447, %v1639
      %v1673 = vsub.f32 %v1448, %v1640
      %v1674 = vsub.f32 %v1449, %v1641
      %v1675 = vsub.f32 %v1450, %v1642
      %v1676 = vsub.f32 %v1451, %v1643
      %v1677 = vsub.f32 %v1452, %v1644
      %v1678 = vmul.f32 %v1646, %v1646
      %v1679 = vmul.f32 %v1647, %v1647
      %v1680 = vmul.f32 %v1648, %v1648
      %v1681 = vmul.f32 %v1649, %v1649
      %v1682 = vmul.f32 %v1650, %v1650
      %v1683 = vmul.f32 %v1651, %v1651
      %v1684 = vmul.f32 %v1652, %v1652
      %v1685 = vmul.f32 %v1653, %v1653
      %v1686 = vmul.f32 %v1654, %v1654
      %v1687 = vmul.f32 %v1655, %v1655
      %v1688 = vmul.f32 %v1656, %v1656
      %v1689 = vmul.f32 %v1657, %v1657
      %v1690 = vmul.f32 %v1658, %v1658
      %v1691 = vmul.f32 %v1659, %v1659
      %v1692 = vmul.f32 %v1660, %v1660
      %v1693 = vmul.f32 %v1661, %v1661
      %v1694 = vmul.f32 %v1662, %v1662
      %v1695 = vmul.f32 %v1663, %v1663
      %v1696 = vmul.f32 %v1664, %v1664
      %v1697 = vmul.f32 %v1665, %v1665
      %v1698 = vmul.f32 %v1666, %v1666
      %v1699 = vmul.f32 %v1667, %v1667
      %v1700 = vmul.f32 %v1668, %v1668
      %v1701 = vmul.f32 %v1669, %v1669
      %v1702 = vmul.f32 %v1670, %v1670
      %v1703 = vmul.f32 %v1671, %v1671
      %v1704 = vmul.f32 %v1672, %v1672
      %v1705 = vmul.f32 %v1673, %v1673
      %v1706 = vmul.f32 %v1674, %v1674
      %v1707 = vmul.f32 %v1675, %v1675
      %v1708 = vmul.f32 %v1676, %v1676
      %v1709 = vmul.f32 %v1677, %v1677
      %v1710 = vlaneseq
      %v1711 = vshrl.u32 %v1710, 7
      %v1712 = vsub.s32 0, %v1711
      %v1713 = vrot.slane %v393, %v1712
      %v1714 = vmul.f32 %v1678, %v1713
      %v1715 = vmul.f32 %v1679, %v1713
      %v1716 = vmul.f32 %v1680, %v1713
      %v1717 = vmul.f32 %v1681, %v1713
      %v1718 = vmul.f32 %v1682, %v1713
      %v1719 = vmul.f32 %v1683, %v1713
      %v1720 = vmul.f32 %v1684, %v1713
      %v1721 = vmul.f32 %v1685, %v1713
      %v1722 = vmul.f32 %v1686, %v1713
      %v1723 = vmul.f32 %v1687, %v1713
      %v1724 = vmul.f32 %v1688, %v1713
      %v1725 = vmul.f32 %v1689, %v1713
      %v1726 = vmul.f32 %v1690, %v1713
      %v1727 = vmul.f32 %v1691, %v1713
      %v1728 = vmul.f32 %v1692, %v1713
      %v1729 = vmul.f32 %v1693, %v1713
      %v1730 = vmul.f32 %v1694, %v1713
      %v1731 = vmul.f32 %v1695, %v1713
      %v1732 = vmul.f32 %v1696, %v1713
      %v1733 = vmul.f32 %v1697, %v1713
      %v1734 = vmul.f32 %v1698, %v1713
      %v1735 = vmul.f32 %v1699, %v1713
      %v1736 = vmul.f32 %v1700, %v1713
      %v1737 = vmul.f32 %v1701, %v1713
      %v1738 = vmul.f32 %v1702, %v1713
      %v1739 = vmul.f32 %v1703, %v1713
      %v1740 = vmul.f32 %v1704, %v1713
      %v1741 = vmul.f32 %v1705, %v1713
      %v1742 = vmul.f32 %v1706, %v1713
      %v1743 = vmul.f32 %v1707, %v1713
      %v1744 = vmul.f32 %v1708, %v1713
      %v1745 = vmul.f32 %v1709, %v1713
      %v1746 = vadd.f32 %v1714, %v1715
      %v1747 = vadd.f32 %v1746, %v1716
      %v1748 = vadd.f32 %v1747, %v1717
      %v1749 = vadd.f32 %v1748, %v1718
      %v1750 = vadd.f32 %v1749, %v1719
      %v1751 = vadd.f32 %v1750, %v1720
      %v1752 = vadd.f32 %v1751, %v1721
      %v1753 = vadd.f32 %v1752, %v1722
      %v1754 = vadd.f32 %v1753, %v1723
      %v1755 = vadd.f32 %v1754, %v1724
      %v1756 = vadd.f32 %v1755, %v1725
      %v1757 = vadd.f32 %v1756, %v1726
      %v1758 = vadd.f32 %v1757, %v1727
      %v1759 = vadd.f32 %v1758, %v1728
      %v1760 = vadd.f32 %v1759, %v1729
      %v1761 = vadd.f32 %v1760, %v1730
      %v1762 = vadd.f32 %v1761, %v1731
      %v1763 = vadd.f32 %v1762, %v1732
      %v1764 = vadd.f32 %v1763, %v1733
      %v1765 = vadd.f32 %v1764, %v1734
      %v1766 = vadd.f32 %v1765, %v1735
      %v1767 = vadd.f32 %v1766, %v1736
      %v1768 = vadd.f32 %v1767, %v1737
      %v1769 = vadd.f32 %v1768, %v1738
      %v1770 = vadd.f32 %v1769, %v1739
      %v1771 = vadd.f32 %v1770, %v1740
      %v1772 = vadd.f32 %v1771, %v1741
      %v1773 = vadd.f32 %v1772, %v1742
      %v1774 = vadd.f32 %v1773, %v1743
      %v1775 = vadd.f32 %v1774, %v1744
      %v1776 = vadd.f32 %v1775, %v1745
      %v1777 = vrot.slane %v1776, 4
      %v1778 = vadd.f32 %v1776, %v1777
      %v1779 = vrot.slane %v1778, 2
      %v1780 = vadd.f32 %v1778, %v1779
      %v1781 = vrot.slane %v1780, 1
      %v1782 = vadd.f32 %v1780, %v1781
      %v1783 = vadd.f32 %v1645, %v1782
      %1784 = vst [vmem:[%s311] sm:$0x1] %v1783
      %vm1785 = vcmp.ge.s32.totalorder %v1054, 12
      %vm1786 = vcmp.lt.s32.totalorder %v1054, 15
      %vm1787 = vmand %vm1785, %vm1786
      %v1788 = vsel %vm1787, 1, 0
      %v1789 = vcvt.s32.f32 %v1788
      %v1790 = vunpack.c.l.bf16 %v324
      %v1791 = vunpack.c.l.bf16 %v325
      %v1792 = vunpack.c.l.bf16 %v326
      %v1793 = vunpack.c.l.bf16 %v327
      %v1794 = vunpack.c.l.bf16 %v328
      %v1795 = vunpack.c.l.bf16 %v329
      %v1796 = vunpack.c.l.bf16 %v330
      %v1797 = vunpack.c.l.bf16 %v331
      %v1798 = vunpack.c.l.bf16 %v332
      %v1799 = vunpack.c.l.bf16 %v333
      %v1800 = vunpack.c.l.bf16 %v334
      %v1801 = vunpack.c.l.bf16 %v335
      %v1802 = vunpack.c.l.bf16 %v336
      %v1803 = vunpack.c.l.bf16 %v337
      %v1804 = vunpack.c.l.bf16 %v338
      %v1805 = vunpack.c.l.bf16 %v339
      %v1806 = vunpack.c.l.bf16 %v340
      %v1807 = vunpack.c.l.bf16 %v341
      %v1808 = vunpack.c.l.bf16 %v342
      %v1809 = vunpack.c.l.bf16 %v343
      %v1810 = vunpack.c.l.bf16 %v344
      %v1811 = vunpack.c.l.bf16 %v345
      %v1812 = vunpack.c.l.bf16 %v346
      %v1813 = vunpack.c.l.bf16 %v347
      %v1814 = vunpack.c.l.bf16 %v348
      %v1815 = vunpack.c.l.bf16 %v349
      %v1816 = vunpack.c.l.bf16 %v350
      %v1817 = vunpack.c.l.bf16 %v351
      %v1818 = vunpack.c.l.bf16 %v352
      %v1819 = vunpack.c.l.bf16 %v353
      %v1820 = vunpack.c.l.bf16 %v354
      %v1821 = vunpack.c.l.bf16 %v355
      %v1822 = vunpack.c.l.bf16 %v356
      %v1823 = vunpack.c.l.bf16 %v357
      %v1824 = vunpack.c.l.bf16 %v358
      %v1825 = vunpack.c.l.bf16 %v359
      %v1826 = vunpack.c.l.bf16 %v360
      %v1827 = vunpack.c.l.bf16 %v361
      %v1828 = vunpack.c.l.bf16 %v362
      %v1829 = vunpack.c.l.bf16 %v363
      %v1830 = vunpack.c.l.bf16 %v364
      %v1831 = vunpack.c.l.bf16 %v365
      %v1832 = vunpack.c.l.bf16 %v366
      %v1833 = vunpack.c.l.bf16 %v367
      %v1834 = vunpack.c.l.bf16 %v368
      %v1835 = vunpack.c.l.bf16 %v369
      %v1836 = vunpack.c.l.bf16 %v370
      %v1837 = vunpack.c.l.bf16 %v371
      %v1838 = vunpack.c.l.bf16 %v372
      %v1839 = vunpack.c.l.bf16 %v373
      %v1840 = vunpack.c.l.bf16 %v374
      %v1841 = vunpack.c.l.bf16 %v375
      %v1842 = vunpack.c.l.bf16 %v376
      %v1843 = vunpack.c.l.bf16 %v377
      %v1844 = vunpack.c.l.bf16 %v378
      %v1845 = vunpack.c.l.bf16 %v379
      %v1846 = vunpack.c.l.bf16 %v380
      %v1847 = vunpack.c.l.bf16 %v381
      %v1848 = vunpack.c.l.bf16 %v382
      %v1849 = vunpack.c.l.bf16 %v383
      %v1850 = vunpack.c.l.bf16 %v384
      %v1851 = vunpack.c.l.bf16 %v385
      %v1852 = vunpack.c.l.bf16 %v386
      %v1853 = vunpack.c.l.bf16 %v387
      %v1854 = vsub.f32 %v1790, %v1822
      %v1855 = vsub.f32 %v1791, %v1823
      %v1856 = vsub.f32 %v1792, %v1824
      %v1857 = vsub.f32 %v1793, %v1825
      %v1858 = vsub.f32 %v1794, %v1826
      %v1859 = vsub.f32 %v1795, %v1827
      %v1860 = vsub.f32 %v1796, %v1828
      %v1861 = vsub.f32 %v1797, %v1829
      %v1862 = vsub.f32 %v1798, %v1830
      %v1863 = vsub.f32 %v1799, %v1831
      %v1864 = vsub.f32 %v1800, %v1832
      %v1865 = vsub.f32 %v1801, %v1833
      %v1866 = vsub.f32 %v1802, %v1834
      %v1867 = vsub.f32 %v1803, %v1835
      %v1868 = vsub.f32 %v1804, %v1836
      %v1869 = vsub.f32 %v1805, %v1837
      %v1870 = vsub.f32 %v1806, %v1838
      %v1871 = vsub.f32 %v1807, %v1839
      %v1872 = vsub.f32 %v1808, %v1840
      %v1873 = vsub.f32 %v1809, %v1841
      %v1874 = vsub.f32 %v1810, %v1842
      %v1875 = vsub.f32 %v1811, %v1843
      %v1876 = vsub.f32 %v1812, %v1844
      %v1877 = vsub.f32 %v1813, %v1845
      %v1878 = vsub.f32 %v1814, %v1846
      %v1879 = vsub.f32 %v1815, %v1847
      %v1880 = vsub.f32 %v1816, %v1848
      %v1881 = vsub.f32 %v1817, %v1849
      %v1882 = vsub.f32 %v1818, %v1850
      %v1883 = vsub.f32 %v1819, %v1851
      %v1884 = vsub.f32 %v1820, %v1852
      %v1885 = vsub.f32 %v1821, %v1853
      %v1886 = vand.u32 2147483647, %v1854
      %v1887 = vand.u32 2147483647, %v1855
      %v1888 = vand.u32 2147483647, %v1856
      %v1889 = vand.u32 2147483647, %v1857
      %v1890 = vand.u32 2147483647, %v1858
      %v1891 = vand.u32 2147483647, %v1859
      %v1892 = vand.u32 2147483647, %v1860
      %v1893 = vand.u32 2147483647, %v1861
      %v1894 = vand.u32 2147483647, %v1862
      %v1895 = vand.u32 2147483647, %v1863
      %v1896 = vand.u32 2147483647, %v1864
      %v1897 = vand.u32 2147483647, %v1865
      %v1898 = vand.u32 2147483647, %v1866
      %v1899 = vand.u32 2147483647, %v1867
      %v1900 = vand.u32 2147483647, %v1868
      %v1901 = vand.u32 2147483647, %v1869
      %v1902 = vand.u32 2147483647, %v1870
      %v1903 = vand.u32 2147483647, %v1871
      %v1904 = vand.u32 2147483647, %v1872
      %v1905 = vand.u32 2147483647, %v1873
      %v1906 = vand.u32 2147483647, %v1874
      %v1907 = vand.u32 2147483647, %v1875
      %v1908 = vand.u32 2147483647, %v1876
      %v1909 = vand.u32 2147483647, %v1877
      %v1910 = vand.u32 2147483647, %v1878
      %v1911 = vand.u32 2147483647, %v1879
      %v1912 = vand.u32 2147483647, %v1880
      %v1913 = vand.u32 2147483647, %v1881
      %v1914 = vand.u32 2147483647, %v1882
      %v1915 = vand.u32 2147483647, %v1883
      %v1916 = vand.u32 2147483647, %v1884
      %v1917 = vand.u32 2147483647, %v1885
      %v1918 = vmul.f32 %v1886, %v1789
      %v1919 = vmul.f32 %v1887, %v1789
      %v1920 = vmul.f32 %v1888, %v1789
      %v1921 = vmul.f32 %v1889, %v1789
      %v1922 = vmul.f32 %v1890, %v1789
      %v1923 = vmul.f32 %v1891, %v1789
      %v1924 = vmul.f32 %v1892, %v1789
      %v1925 = vmul.f32 %v1893, %v1789
      %v1926 = vmul.f32 %v1894, %v1789
      %v1927 = vmul.f32 %v1895, %v1789
      %v1928 = vmul.f32 %v1896, %v1789
      %v1929 = vmul.f32 %v1897, %v1789
      %v1930 = vmul.f32 %v1898, %v1789
      %v1931 = vmul.f32 %v1899, %v1789
      %v1932 = vmul.f32 %v1900, %v1789
      %v1933 = vmul.f32 %v1901, %v1789
      %v1934 = vmul.f32 %v1902, %v1789
      %v1935 = vmul.f32 %v1903, %v1789
      %v1936 = vmul.f32 %v1904, %v1789
      %v1937 = vmul.f32 %v1905, %v1789
      %v1938 = vmul.f32 %v1906, %v1789
      %v1939 = vmul.f32 %v1907, %v1789
      %v1940 = vmul.f32 %v1908, %v1789
      %v1941 = vmul.f32 %v1909, %v1789
      %v1942 = vmul.f32 %v1910, %v1789
      %v1943 = vmul.f32 %v1911, %v1789
      %v1944 = vmul.f32 %v1912, %v1789
      %v1945 = vmul.f32 %v1913, %v1789
      %v1946 = vmul.f32 %v1914, %v1789
      %v1947 = vmul.f32 %v1915, %v1789
      %v1948 = vmul.f32 %v1916, %v1789
      %v1949 = vmul.f32 %v1917, %v1789
      %v1950 = vld [vmem:[%s314] sm:$0x1]
      %v1951 = vsel %vm490, %v1918, 0.0
      %v1952 = vsel %vm490, %v1919, 0.0
      %v1953 = vadd.f32 %v1951, %v1952
      %v1954 = vsel %vm490, %v1920, 0.0
      %v1955 = vadd.f32 %v1953, %v1954
      %v1956 = vsel %vm490, %v1921, 0.0
      %v1957 = vadd.f32 %v1955, %v1956
      %v1958 = vsel %vm490, %v1922, 0.0
      %v1959 = vadd.f32 %v1957, %v1958
      %v1960 = vsel %vm490, %v1923, 0.0
      %v1961 = vadd.f32 %v1959, %v1960
      %v1962 = vsel %vm490, %v1924, 0.0
      %v1963 = vadd.f32 %v1961, %v1962
      %v1964 = vsel %vm490, %v1925, 0.0
      %v1965 = vadd.f32 %v1963, %v1964
      %v1966 = vsel %vm490, %v1926, 0.0
      %v1967 = vadd.f32 %v1965, %v1966
      %v1968 = vsel %vm490, %v1927, 0.0
      %v1969 = vadd.f32 %v1967, %v1968
      %v1970 = vsel %vm490, %v1928, 0.0
      %v1971 = vadd.f32 %v1969, %v1970
      %v1972 = vsel %vm490, %v1929, 0.0
      %v1973 = vadd.f32 %v1971, %v1972
      %v1974 = vsel %vm490, %v1930, 0.0
      %v1975 = vadd.f32 %v1973, %v1974
      %v1976 = vsel %vm490, %v1931, 0.0
      %v1977 = vadd.f32 %v1975, %v1976
      %v1978 = vsel %vm490, %v1932, 0.0
      %v1979 = vadd.f32 %v1977, %v1978
      %v1980 = vsel %vm490, %v1933, 0.0
      %v1981 = vadd.f32 %v1979, %v1980
      %v1982 = vsel %vm490, %v1934, 0.0
      %v1983 = vadd.f32 %v1981, %v1982
      %v1984 = vsel %vm490, %v1935, 0.0
      %v1985 = vadd.f32 %v1983, %v1984
      %v1986 = vsel %vm490, %v1936, 0.0
      %v1987 = vadd.f32 %v1985, %v1986
      %v1988 = vsel %vm490, %v1937, 0.0
      %v1989 = vadd.f32 %v1987, %v1988
      %v1990 = vsel %vm490, %v1938, 0.0
      %v1991 = vadd.f32 %v1989, %v1990
      %v1992 = vsel %vm490, %v1939, 0.0
      %v1993 = vadd.f32 %v1991, %v1992
      %v1994 = vsel %vm490, %v1940, 0.0
      %v1995 = vadd.f32 %v1993, %v1994
      %v1996 = vsel %vm490, %v1941, 0.0
      %v1997 = vadd.f32 %v1995, %v1996
      %v1998 = vsel %vm490, %v1942, 0.0
      %v1999 = vadd.f32 %v1997, %v1998
      %v2000 = vsel %vm490, %v1943, 0.0
      %v2001 = vadd.f32 %v1999, %v2000
      %v2002 = vsel %vm490, %v1944, 0.0
      %v2003 = vadd.f32 %v2001, %v2002
      %v2004 = vsel %vm490, %v1945, 0.0
      %v2005 = vadd.f32 %v2003, %v2004
      %v2006 = vsel %vm490, %v1946, 0.0
      %v2007 = vadd.f32 %v2005, %v2006
      %v2008 = vsel %vm490, %v1947, 0.0
      %v2009 = vadd.f32 %v2007, %v2008
      %v2010 = vsel %vm490, %v1948, 0.0
      %v2011 = vadd.f32 %v2009, %v2010
      %v2012 = vsel %vm490, %v1949, 0.0
      %v2013 = vadd.f32 %v2011, %v2012
      %v2014 = vrot.slane %v2013, 4
      %v2015 = vadd.f32 %v2013, %v2014
      %v2016 = vrot.slane %v2015, 2
      %v2017 = vadd.f32 %v2015, %v2016
      %v2018 = vrot.slane %v2017, 1
      %v2019 = vadd.f32 %v2017, %v2018
      %v2020 = vadd.f32 %v1950, %v2019
      %vm2021 = vcmask 253952
      %2022 = vst.msk [vmem:[%s314] sm:$0x1] %vm2021, %v2020
      %p2023 = scmp.lt.s32.totalorder %s22, 1
      %s2024 = scalar_select %p2023, %s22, 1
      %s2025 = scalar_lea.vmem %s4, %s2024
      %p2026 = scmp.lt.s32.totalorder %s22, 1
      %s2027 = scalar_select %p2026, %s22, 1
      %s2028 = scalar_lea.vmem %s5, %s2027
      %p2029 = scmp.lt.s32.totalorder %s22, 1
      %s2030 = scalar_select %p2029, %s22, 1
      %s2031 = scalar_lea.vmem %s6, %s2030
      // Predicated region
      $region41: #{gradnorm_loss.1} parent=35 // pred_check
        %p2032 = pneg %p146
      $region42: #{gradnorm_loss.1} parent=35 // pred_check_branch
        %2034 = sbr.rel (%p2032) target = $region44
      $region43: #{gradnorm_loss.1} parent=35 // pred_region
        _
      $region44: #{gradnorm_loss.1} parent=35 // pred_fallthru
        _
      // Predicated region
      $region45: #{gradnorm_loss.1} parent=35 // pred_check
        %p2035 = pneg %p172
      $region46: #{gradnorm_loss.1} parent=35 // pred_check_branch
        %2037 = sbr.rel (%p2035) target = $region48
      $region47: #{gradnorm_loss.1} parent=35 // pred_region
        _
      $region48: #{gradnorm_loss.1} parent=35 // pred_fallthru
        _
      // Predicated region
      $region49: #{gradnorm_loss.1} parent=35 // pred_check
        %p2038 = pneg %p198
      $region50: #{gradnorm_loss.1} parent=35 // pred_check_branch
        %2040 = sbr.rel (%p2038) target = $region52
      $region51: #{gradnorm_loss.1} parent=35 // pred_region
        _
      $region52: #{gradnorm_loss.1} parent=35 // pred_fallthru
        _
    $region36: #{gradnorm_loss.1} parent=5 // pred_fallthru
      _
    %p2041 = scmp.le.s32.totalorder 2, %s13
    // Predicated region
    $region53: #{gradnorm_loss.1} parent=5 // pred_check
      %p2042 = pneg %p2041
    $region54: #{gradnorm_loss.1} parent=5 // pred_check_branch
      %2044 = sbr.rel (%p2042) target = $region56
    $region55: #{gradnorm_loss.1} parent=5 // pred_region
      %s2045 = ssub.s32 %s13, 2
      // Predicated region
      $region57: #{gradnorm_loss.1} parent=55 // pred_check
        %p2046 = pneg %p152
      $region58: #{gradnorm_loss.1} parent=55 // pred_check_branch
        %2048 = sbr.rel (%p2046) target = $region60
      $region59: #{gradnorm_loss.1} parent=55 // pred_region
        %p2049 = scmp.lt.s32.totalorder %s24, 1
        %s2050 = scalar_select %p2049, %s24, 1
        %s2051 = scalar_lea.vmem %s4, %s2050
      $region60: #{gradnorm_loss.1} parent=55 // pred_fallthru
        _
      // Predicated region
      $region61: #{gradnorm_loss.1} parent=55 // pred_check
        %p2052 = pneg %p178
      $region62: #{gradnorm_loss.1} parent=55 // pred_check_branch
        %2054 = sbr.rel (%p2052) target = $region64
      $region63: #{gradnorm_loss.1} parent=55 // pred_region
        %p2055 = scmp.lt.s32.totalorder %s24, 1
        %s2056 = scalar_select %p2055, %s24, 1
        %s2057 = scalar_lea.vmem %s5, %s2056
      $region64: #{gradnorm_loss.1} parent=55 // pred_fallthru
        _
      // Predicated region
      $region65: #{gradnorm_loss.1} parent=55 // pred_check
        %p2058 = pneg %p204
      $region66: #{gradnorm_loss.1} parent=55 // pred_check_branch
        %2060 = sbr.rel (%p2058) target = $region68
      $region67: #{gradnorm_loss.1} parent=55 // pred_region
        %p2061 = scmp.lt.s32.totalorder %s24, 1
        %s2062 = scalar_select %p2061, %s24, 1
        %s2063 = scalar_lea.vmem %s6, %s2062
      $region68: #{gradnorm_loss.1} parent=55 // pred_fallthru
        _
    $region56: #{gradnorm_loss.1} parent=5 // pred_fallthru
      _
  $region6: #{gradnorm_loss.1} parent=0 // loop_footer
    %s17 = sadd.s32 1, %s13
  $region7: #{gradnorm_loss.1} parent=0 // loop_footer_branch
    %12 = sbr.rel target = $region3
  $region8: #{gradnorm_loss.1} parent=0 // loop_exit
    _

</llo_original>
